<compile_context>
chip_gen: v6e
topology: v6e:2x2x1
jax: 0.10.0
libtpu: 0.0.40
codegen_flags: <defaults>
</compile_context>

<pallas_src>
import functools

import jax
import jax.numpy as jnp
from jax import lax
from jax.experimental import pallas as pl
from jax.experimental.pallas import tpu as pltpu


def _round_up(x, m):
    return ((x + m - 1) // m) * m


def _cdiv(a, b):
    return (a + b - 1) // b


def _qnet_kernel(num_linear, *refs):
    """One batch tile of the MLP (activations carried as (feature, batch)).

    refs = (w_0, b_0, w_1, b_1, ..., w_{L-1}, b_{L-1}, x_ref, out_ref)
      w_i:     (out_pad_i, in_pad_i) f32  PyTorch (out, in) layout, zero-padded.
      b_i:     (out_pad_i, 1)        f32  zero-padded.
      x_ref:   (TB, dim_obs)         f32  observations, natural layout.
      out_ref: (a_pad, TB)           f32  Q-values, batch on lanes.
    """
    x_ref, out_ref = refs[-2], refs[-1]
    w_refs = refs[0:2 * num_linear:2]
    b_refs = refs[1:2 * num_linear:2]
    hi = lax.Precision.HIGHEST

    # Layer 0: contract the feature axis of the natural (TB, dim_obs) tile so the
    # batch lands on the 128-lane axis without any wrapper transpose pass.
    z = lax.dot_general(
        w_refs[0][...], x_ref[...],
        dimension_numbers=(((1,), (1,)), ((), ())),
        preferred_element_type=jnp.float32,
        precision=hi,
    ) + b_refs[0][...]

    if num_linear == 1:                       # degenerate: no hidden layers
        out_ref[...] = z
        return

    h = jnp.tanh(z)                           # (out_pad_0, TB): tanh only on real rows

    # Remaining hidden layers: h = tanh(W @ h + b), all f32.
    for i in range(1, num_linear - 1):
        z = jnp.dot(w_refs[i][...], h,
                    preferred_element_type=jnp.float32, precision=hi) + b_refs[i][...]
        h = jnp.tanh(z)

    # Output layer: linear, no activation; lane-dense (a_pad, TB) store.
    out_ref[...] = jnp.dot(w_refs[num_linear - 1][...], h,
                           preferred_element_type=jnp.float32,
                           precision=hi) + b_refs[num_linear - 1][...]


def qnetwork_forward(x, weights, biases, *, block_b=4096):
    """Vector-obs QNetwork forward pass in one Pallas kernel.

    Args:
      x:       (B, dim_obs) observations.
      weights: PyTorch-layout weights [(out_i, in_i), ...], hidden layers then output.
      biases:  biases [(out_i,), ...], hidden layers then output.
      block_b: target batch tile size (rounded to a multiple of 128, capped at 8192
               so per-step VMEM stays far inside every generation's scoped budget,
               including v7x's 64 MiB / 32 MiB scoped default).
    Returns:
      (B, dim_action) float32 Q-values.
    """
    x = jnp.asarray(x, jnp.float32)
    B, dim_obs = x.shape
    num_linear = len(weights)
    dim_action = weights[-1].shape[0]
    assert len(biases) == num_linear

    # ---- Batch tiling: large tiles amortize the per-grid-step overhead; keep the
    # tile count even (and >=2 when the batch allows) so v7x's two TensorCores
    # stay balanced.  Worst-case extra padding is < 1 tile of batch rows.
    block_b = min(block_b, 8192)
    b128 = _round_up(B, 128)
    tb = max(128, min(_round_up(block_b, 128), b128))
    grid_n = _cdiv(b128, tb)
    if grid_n == 1 and b128 > 128:
        grid_n = 2
    elif grid_n > 1 and grid_n % 2 == 1:
        grid_n += 1
    tb = _round_up(_cdiv(b128, grid_n), 128)
    b_pad = tb * grid_n

    # ---- Per-layer exact(ish)-size zero padding: rows -> multiple of 8, columns ->
    # previous layer's padded rows (dim_obs for layer 0).  Padded bias rows are 0 so
    # tanh(0) = 0 keeps padded activation rows at exactly 0 for the next contraction.
    padded_ws, padded_bs = [], []
    in_pad = dim_obs
    for w, b in zip(weights, biases):
        w = jnp.asarray(w, jnp.float32)
        b = jnp.asarray(b, jnp.float32)
        out_dim, in_dim = w.shape
        out_pad = _round_up(out_dim, 8)
        padded_ws.append(
            jnp.zeros((out_pad, in_pad), jnp.float32).at[:out_dim, :in_dim].set(w))
        padded_bs.append(
            jnp.zeros((out_pad, 1), jnp.float32).at[:out_dim, 0].set(b))
        in_pad = out_pad
    a_pad = padded_ws[-1].shape[0]

    # ---- Observations stay in their natural (B, dim_obs) f32 layout: no wrapper
    # transpose / cast pass.  Only the batch remainder is padded (no-op if aligned).
    if b_pad != B:
        x = jnp.pad(x, ((0, b_pad - B), (0, 0)))

    # Operands: interleaved (w_i, b_i) params (constant index_map -> DMA'd once,
    # VMEM-resident across grid steps), then the batch-tiled observations.
    operands, in_specs = [], []
    const_map = lambda i: (0, 0)
    for wp, bp in zip(padded_ws, padded_bs):
        operands += [wp, bp]
        in_specs += [pl.BlockSpec(wp.shape, const_map),
                     pl.BlockSpec(bp.shape, const_map)]
    operands.append(x)
    in_specs.append(pl.BlockSpec((tb, dim_obs), lambda i: (i, 0)))

    flops = 2 * b_pad * sum(int(w.shape[0]) * int(w.shape[1]) for w in padded_ws)
    transcendentals = b_pad * sum(int(w.shape[0]) for w in padded_ws[:-1])
    bytes_accessed = 4 * (b_pad * dim_obs + a_pad * b_pad
                          + sum(int(w.size) for w in padded_ws)
                          + sum(int(b.size) for b in padded_bs))

    kernel = functools.partial(_qnet_kernel, num_linear)
    out_padded = pl.pallas_call(
        kernel,
        out_shape=jax.ShapeDtypeStruct((a_pad, b_pad), jnp.float32),
        grid=(grid_n,),
        in_specs=in_specs,
        out_specs=pl.BlockSpec((a_pad, tb), lambda i: (0, i)),
        compiler_params=pltpu.CompilerParams(
            dimension_semantics=("parallel",),   # v7x: shard batch tiles over both TCs
        ),
        cost_estimate=pl.CostEstimate(flops=flops,
                                      transcendentals=transcendentals,
                                      bytes_accessed=bytes_accessed),
    )(*operands)

    # Tiny (dim_action x B) slice + transpose kept in the wrapper: it keeps the
    # kernel's output stores lane-dense and its out VMEM buffer 16x smaller than a
    # (TB, a_pad) layout would be, at the cost of one pass over a dim_action-wide array.
    return out_padded[:dim_action, :B].T


def _xavier_uniform(key, out_dim, in_dim):
    # Matches torch.nn.init.xavier_uniform_ (gain=1): U(-a, a), a = sqrt(6/(fan_in+fan_out))
    a = jnp.sqrt(6.0 / (in_dim + out_dim))
    return jax.random.uniform(key, (out_dim, in_dim), jnp.float32, -a, a)


def _reference_forward(x, weights, biases):
    """Pure-JAX reference with f32 storage and HIGHEST-precision matmuls."""
    hi = lax.Precision.HIGHEST
    h = jnp.asarray(x, jnp.float32)
    for w, b in zip(weights[:-1], biases[:-1]):
        h = jnp.tanh(jnp.dot(h, w.T, precision=hi) + b)
    return jnp.dot(h, weights[-1].T, precision=hi) + biases[-1]


if __name__ == "__main__":
    # Small shapes consistent with the module:
    #   dim_obs=16, dims_hidden_neurons=(32, 32), dim_action=4, batch=200
    batch = 200
    dim_obs = 16
    dims_hidden = (32, 32)
    dim_action = 4

    key = jax.random.PRNGKey(0)
    k_obs, k_b, *k_ws = jax.random.split(key, 3 + len(dims_hidden))

    n_neurons = (dim_obs,) + dims_hidden + (dim_action,)
    kb = jax.random.split(k_b, len(n_neurons) - 1)
    weights, biases = [], []
    for i, (d_in, d_out) in enumerate(zip(n_neurons[:-1], n_neurons[1:])):
        weights.append(_xavier_uniform(k_ws[i], d_out, d_in))   # PyTorch layout (out, in)
        # Module inits biases to zero; small random biases here so the bias path
        # is actually exercised by the numerical check.
        biases.append(0.1 * jax.random.normal(kb[i], (d_out,), jnp.float32))

    x = jax.random.normal(k_obs, (batch, dim_obs), jnp.float32)

    # block_b=128 -> batch padded to 256 -> 2 batch tiles: exercises the tiled,
    # megacore-friendly (even-grid) pipeline even at this small test size.
    out = qnetwork_forward(x, weights, biases, block_b=128)
    out = jax.block_until_ready(out)
    assert out.shape == (batch, dim_action)

    # f32 + Precision.HIGHEST matmuls: typically agrees with the f32 reference to
    # ~1e-5; the bound below is kept loose only to absorb EUP-tanh approximation
    # differences, and is still far tighter than a bf16-operand kernel would allow.
    ref = _reference_forward(x, weights, biases)
    err = float(jnp.max(jnp.abs(out - ref)))
    assert err < 5e-2, err

    print("KERNEL_OK")
</pallas_src>

<mosaic_0001>
module attributes {stable_mosaic.version = 11 : i64} {
  func.func @_qnet_kernel(%arg0: i32, %arg1: memref<32x16xf32, #tpu.memory_space<vmem>>, %arg2: memref<32x1xf32, #tpu.memory_space<vmem>>, %arg3: memref<32x32xf32, #tpu.memory_space<vmem>>, %arg4: memref<32x1xf32, #tpu.memory_space<vmem>>, %arg5: memref<8x32xf32, #tpu.memory_space<vmem>>, %arg6: memref<8x1xf32, #tpu.memory_space<vmem>>, %arg7: memref<128x16xf32, #tpu.memory_space<vmem>>, %arg8: memref<8x128xf32, #tpu.memory_space<vmem>>) attributes {dimension_semantics = [#tpu.dimension_semantics<parallel>], iteration_bounds = array<i64: 2>, scalar_prefetch = 0 : i64, scratch_operands = 0 : i64, tpu.core_type = #tpu.core_type<tc>, window_params = [{pipeline_mode = #tpu.pipeline_mode<synchronous>, transform_indices = @transform_0, window_bounds = array<i64: 32, 16>}, {pipeline_mode = #tpu.pipeline_mode<synchronous>, transform_indices = @transform_1, window_bounds = array<i64: 32, 1>}, {pipeline_mode = #tpu.pipeline_mode<synchronous>, transform_indices = @transform_2, window_bounds = array<i64: 32, 32>}, {pipeline_mode = #tpu.pipeline_mode<synchronous>, transform_indices = @transform_3, window_bounds = array<i64: 32, 1>}, {pipeline_mode = #tpu.pipeline_mode<synchronous>, transform_indices = @transform_4, window_bounds = array<i64: 8, 32>}, {pipeline_mode = #tpu.pipeline_mode<synchronous>, transform_indices = @transform_5, window_bounds = array<i64: 8, 1>}, {transform_indices = @transform_6, window_bounds = array<i64: 128, 16>}, {transform_indices = @transform_7, window_bounds = array<i64: 8, 128>}]} {
    %c0 = arith.constant 0 : index
    %c0_0 = arith.constant 0 : index
    %0 = vector.load %arg1[%c0, %c0_0] : memref<32x16xf32, #tpu.memory_space<vmem>>, vector<32x16xf32>
    %c0_1 = arith.constant 0 : index
    %c0_2 = arith.constant 0 : index
    %1 = vector.load %arg7[%c0_1, %c0_2] : memref<128x16xf32, #tpu.memory_space<vmem>>, vector<128x16xf32>
    %cst = arith.constant dense<0.000000e+00> : vector<32x128xf32>
    %2 = tpu.matmul %0, %1, %cst {dimension_numbers = #tpu.dot_dimension_numbers<[1], [1], [0], [0], [0, 0, 1, 0], [], []>, precision = #tpu.contract_precision<fp32>} : vector<32x16xf32>, vector<128x16xf32>, vector<32x128xf32> -> vector<32x128xf32>
    %c0_3 = arith.constant 0 : index
    %c0_4 = arith.constant 0 : index
    %3 = vector.load %arg2[%c0_3, %c0_4] : memref<32x1xf32, #tpu.memory_space<vmem>>, vector<32x1xf32>
    %4 = vector.broadcast %3 : vector<32x1xf32> to vector<32x128xf32>
    %5 = arith.addf %2, %4 : vector<32x128xf32>
    %6 = math.tanh %5 : vector<32x128xf32>
    %c0_5 = arith.constant 0 : index
    %c0_6 = arith.constant 0 : index
    %7 = vector.load %arg3[%c0_5, %c0_6] : memref<32x32xf32, #tpu.memory_space<vmem>>, vector<32x32xf32>
    %cst_7 = arith.constant dense<0.000000e+00> : vector<32x128xf32>
    %8 = tpu.matmul %7, %6, %cst_7 {dimension_numbers = #tpu.dot_dimension_numbers<[1], [0], [0], [1], [0, 0, 1, 1], [], []>, precision = #tpu.contract_precision<fp32>} : vector<32x32xf32>, vector<32x128xf32>, vector<32x128xf32> -> vector<32x128xf32>
    %c0_8 = arith.constant 0 : index
    %c0_9 = arith.constant 0 : index
    %9 = vector.load %arg4[%c0_8, %c0_9] : memref<32x1xf32, #tpu.memory_space<vmem>>, vector<32x1xf32>
    %10 = vector.broadcast %9 : vector<32x1xf32> to vector<32x128xf32>
    %11 = arith.addf %8, %10 : vector<32x128xf32>
    %12 = math.tanh %11 : vector<32x128xf32>
    %c0_10 = arith.constant 0 : index
    %c0_11 = arith.constant 0 : index
    %13 = vector.load %arg5[%c0_10, %c0_11] : memref<8x32xf32, #tpu.memory_space<vmem>>, vector<8x32xf32>
    %cst_12 = arith.constant dense<0.000000e+00> : vector<8x128xf32>
    %14 = tpu.matmul %13, %12, %cst_12 {dimension_numbers = #tpu.dot_dimension_numbers<[1], [0], [0], [1], [0, 0, 1, 1], [], []>, precision = #tpu.contract_precision<fp32>} : vector<8x32xf32>, vector<32x128xf32>, vector<8x128xf32> -> vector<8x128xf32>
    %c0_13 = arith.constant 0 : index
    %c0_14 = arith.constant 0 : index
    %15 = vector.load %arg6[%c0_13, %c0_14] : memref<8x1xf32, #tpu.memory_space<vmem>>, vector<8x1xf32>
    %16 = vector.broadcast %15 : vector<8x1xf32> to vector<8x128xf32>
    %17 = arith.addf %14, %16 : vector<8x128xf32>
    %c0_15 = arith.constant 0 : index
    %c0_16 = arith.constant 0 : index
    %18 = vector.load %arg8[%c0_15, %c0_16] : memref<8x128xf32, #tpu.memory_space<vmem>>, vector<8x128xf32>
    tpu.vector_store %arg8[%c0_15, %c0_16], %17 {strides = array<i32>} : memref<8x128xf32, #tpu.memory_space<vmem>>, vector<8x128xf32>,
    return
  }
  func.func @transform_0(%arg0: i32) -> (i32, i32) {
    %c0_i32 = arith.constant 0 : i32
    %c0_i32_0 = arith.constant 0 : i32
    %c0_i32_1 = arith.constant 0 : i32
    return %c0_i32, %c0_i32_0 : i32, i32
  }
  func.func @transform_1(%arg0: i32) -> (i32, i32) {
    %c0_i32 = arith.constant 0 : i32
    %c0_i32_0 = arith.constant 0 : i32
    %c0_i32_1 = arith.constant 0 : i32
    return %c0_i32, %c0_i32_0 : i32, i32
  }
  func.func @transform_2(%arg0: i32) -> (i32, i32) {
    %c0_i32 = arith.constant 0 : i32
    %c0_i32_0 = arith.constant 0 : i32
    %c0_i32_1 = arith.constant 0 : i32
    return %c0_i32, %c0_i32_0 : i32, i32
  }
  func.func @transform_3(%arg0: i32) -> (i32, i32) {
    %c0_i32 = arith.constant 0 : i32
    %c0_i32_0 = arith.constant 0 : i32
    %c0_i32_1 = arith.constant 0 : i32
    return %c0_i32, %c0_i32_0 : i32, i32
  }
  func.func @transform_4(%arg0: i32) -> (i32, i32) {
    %c0_i32 = arith.constant 0 : i32
    %c0_i32_0 = arith.constant 0 : i32
    %c0_i32_1 = arith.constant 0 : i32
    return %c0_i32, %c0_i32_0 : i32, i32
  }
  func.func @transform_5(%arg0: i32) -> (i32, i32) {
    %c0_i32 = arith.constant 0 : i32
    %c0_i32_0 = arith.constant 0 : i32
    %c0_i32_1 = arith.constant 0 : i32
    return %c0_i32, %c0_i32_0 : i32, i32
  }
  func.func @transform_6(%arg0: i32) -> (i32, i32) {
    %c0_i32 = arith.constant 0 : i32
    %c0_i32_0 = arith.constant 0 : i32
    return %arg0, %c0_i32 : i32, i32
  }
  func.func @transform_7(%arg0: i32) -> (i32, i32) {
    %c0_i32 = arith.constant 0 : i32
    %c0_i32_0 = arith.constant 0 : i32
    return %c0_i32, %arg0 : i32, i32
  }
}

</mosaic_0001>

<llo_original>
// kernel: tpu_custom_call.1
$region0: #{tpu_custom_call.1}
  #allocation0 [shape = 'u32[]', space=smem, size = 0x4, offset = 0x4, fixed_abs, tag = 'smem constant byte address 0x4 - core index']
  #allocation1 [shape = 'u32[144,128]{1,0:T(1,128)}', space=vmem, size = 0x12000, scoped, tag = 'internal scratch']
  %s0 = inlined_call_operand.vmem [shape: f32[32,16], index: 0, kind: input, shape index: {}]
  %s1 = inlined_call_operand.vmem [shape: f32[32,1], index: 1, kind: input, shape index: {}]
  %s2 = inlined_call_operand.vmem [shape: f32[32,32], index: 2, kind: input, shape index: {}]
  %s3 = inlined_call_operand.vmem [shape: f32[32,1], index: 3, kind: input, shape index: {}]
  %s4 = inlined_call_operand.vmem [shape: f32[8,32], index: 4, kind: input, shape index: {}]
  %s5 = inlined_call_operand.vmem [shape: f32[8,1], index: 5, kind: input, shape index: {}]
  %s6 = inlined_call_operand.vmem [shape: f32[256,16], index: 6, kind: input, shape index: {}]
  %s7 = inlined_call_operand.hbm [shape: f32[8,256], index: 7, kind: output, shape index: {}]
  %s8 = sld [smem:[#allocation0]]
  $region61: #{tpu_custom_call.1} parent=0
    _
  %s10 = ssub.s32 1, %s8
  %s11 = scalar_select 0, %s10, %s8
  $region1: #{tpu_custom_call.1} parent=0
    #allocation2 [shape = 'u8[8192]{0}', space=vmem, size = 0x2000, scoped, tag = 'output window, operand 0']
    #allocation3 [shape = 's32[2]{0}', space=sflag, size = 0x8, scoped, tag = 'scoped memory for tpu_custom_call.1']
    %12 = vsyncpa [#allocation3], 0
    %s13 = scalar_lea.sflag [#allocation3], 1
    %14 = vsyncpa %s13, 0
    loop: start=0, step=1, limit=4
    $region2: #{tpu_custom_call.1} parent=1 // loop_pre_header
      _
    $region3: #{tpu_custom_call.1} parent=1 // loop_header
      %s16 = sphi 0, %s20
      %p17 = scmp.ge.s32.totalorder %s16, 4
      %s24 = sphi 0, %s24
      %s26 = sphi 0, %s24
      %s27 = sphi 0, %s26
      %s41 = sphi 0, %s27
      %s45 = sphi 0, %s45
      %s47 = sphi 0, %s45
      %s48 = sphi 0, %s47
      %s62 = sphi 0, %s48
      %s66 = sphi 0, %s66
      %s68 = sphi 0, %s66
      %s69 = sphi 0, %s68
      %s83 = sphi 0, %s69
      %s87 = sphi 0, %s87
      %s89 = sphi 0, %s87
      %s90 = sphi 0, %s89
      %s104 = sphi 0, %s90
      %s108 = sphi 0, %s108
      %s110 = sphi 0, %s108
      %s111 = sphi 0, %s110
      %s125 = sphi 0, %s111
      %s129 = sphi 0, %s129
      %s131 = sphi 0, %s129
      %s132 = sphi 0, %s131
      %s146 = sphi 0, %s132
      %s152 = sphi 0, %s154
      %s155 = sphi 0, %s152
      %s156 = sphi 0, %s155
      %s172 = sphi 0, %s156
      %s178 = sphi 0, %s180
      %s181 = sphi 0, %s178
      %s182 = sphi 0, %s181
      %s198 = sphi 0, %s182
    $region4: #{tpu_custom_call.1} parent=1 // loop_header_branch
      %19 = sbr.rel (%p17) target = $region8
    $region5: #{tpu_custom_call.1} parent=1 // loop_body
      %s21 = ssub.s32 %s16, 1
      %s22 = ssub.s32 %s16, 2
      %s23 = sadd.s32 %s16, 1
      %s25 = sadd.s32 %s24, 1
      %p28 = scmp.eq.s32.totalorder %s16, 1
      %p29 = scmp.ne.s32.totalorder %s24, %s26
      %p30 = scmp.eq.s32.totalorder %s16, 0
      %p31 = por %p29, %p30
      %p32 = scmp.ne.s32.totalorder %s24, %s26
      %p33 = scmp.eq.s32.totalorder %s21, 1
      %p34 = por %p32, %p33
      %p35 = scmp.ne.s32.totalorder %s26, %s27
      %p36 = scmp.eq.s32.totalorder %s21, 0
      %p37 = por %p35, %p36
      %p38 = scmp.ne.s32.totalorder %s26, %s27
      %p39 = scmp.eq.s32.totalorder %s22, 1
      %p40 = por %p38, %p39
      %p42 = scmp.ne.s32.totalorder %s27, %s41
      %p43 = scmp.eq.s32.totalorder %s22, 0
      %p44 = por %p42, %p43
      %s46 = sadd.s32 %s45, 1
      %p49 = scmp.eq.s32.totalorder %s16, 1
      %p50 = scmp.ne.s32.totalorder %s45, %s47
      %p51 = scmp.eq.s32.totalorder %s16, 0
      %p52 = por %p50, %p51
      %p53 = scmp.ne.s32.totalorder %s45, %s47
      %p54 = scmp.eq.s32.totalorder %s21, 1
      %p55 = por %p53, %p54
      %p56 = scmp.ne.s32.totalorder %s47, %s48
      %p57 = scmp.eq.s32.totalorder %s21, 0
      %p58 = por %p56, %p57
      %p59 = scmp.ne.s32.totalorder %s47, %s48
      %p60 = scmp.eq.s32.totalorder %s22, 1
      %p61 = por %p59, %p60
      %p63 = scmp.ne.s32.totalorder %s48, %s62
      %p64 = scmp.eq.s32.totalorder %s22, 0
      %p65 = por %p63, %p64
      %s67 = sadd.s32 %s66, 1
      %p70 = scmp.eq.s32.totalorder %s16, 1
      %p71 = scmp.ne.s32.totalorder %s66, %s68
      %p72 = scmp.eq.s32.totalorder %s16, 0
      %p73 = por %p71, %p72
      %p74 = scmp.ne.s32.totalorder %s66, %s68
      %p75 = scmp.eq.s32.totalorder %s21, 1
      %p76 = por %p74, %p75
      %p77 = scmp.ne.s32.totalorder %s68, %s69
      %p78 = scmp.eq.s32.totalorder %s21, 0
      %p79 = por %p77, %p78
      %p80 = scmp.ne.s32.totalorder %s68, %s69
      %p81 = scmp.eq.s32.totalorder %s22, 1
      %p82 = por %p80, %p81
      %p84 = scmp.ne.s32.totalorder %s69, %s83
      %p85 = scmp.eq.s32.totalorder %s22, 0
      %p86 = por %p84, %p85
      %s88 = sadd.s32 %s87, 1
      %p91 = scmp.eq.s32.totalorder %s16, 1
      %p92 = scmp.ne.s32.totalorder %s87, %s89
      %p93 = scmp.eq.s32.totalorder %s16, 0
      %p94 = por %p92, %p93
      %p95 = scmp.ne.s32.totalorder %s87, %s89
      %p96 = scmp.eq.s32.totalorder %s21, 1
      %p97 = por %p95, %p96
      %p98 = scmp.ne.s32.totalorder %s89, %s90
      %p99 = scmp.eq.s32.totalorder %s21, 0
      %p100 = por %p98, %p99
      %p101 = scmp.ne.s32.totalorder %s89, %s90
      %p102 = scmp.eq.s32.totalorder %s22, 1
      %p103 = por %p101, %p102
      %p105 = scmp.ne.s32.totalorder %s90, %s104
      %p106 = scmp.eq.s32.totalorder %s22, 0
      %p107 = por %p105, %p106
      %s109 = sadd.s32 %s108, 1
      %p112 = scmp.eq.s32.totalorder %s16, 1
      %p113 = scmp.ne.s32.totalorder %s108, %s110
      %p114 = scmp.eq.s32.totalorder %s16, 0
      %p115 = por %p113, %p114
      %p116 = scmp.ne.s32.totalorder %s108, %s110
      %p117 = scmp.eq.s32.totalorder %s21, 1
      %p118 = por %p116, %p117
      %p119 = scmp.ne.s32.totalorder %s110, %s111
      %p120 = scmp.eq.s32.totalorder %s21, 0
      %p121 = por %p119, %p120
      %p122 = scmp.ne.s32.totalorder %s110, %s111
      %p123 = scmp.eq.s32.totalorder %s22, 1
      %p124 = por %p122, %p123
      %p126 = scmp.ne.s32.totalorder %s111, %s125
      %p127 = scmp.eq.s32.totalorder %s22, 0
      %p128 = por %p126, %p127
      %s130 = sadd.s32 %s129, 1
      %p133 = scmp.eq.s32.totalorder %s16, 1
      %p134 = scmp.ne.s32.totalorder %s129, %s131
      %p135 = scmp.eq.s32.totalorder %s16, 0
      %p136 = por %p134, %p135
      %p137 = scmp.ne.s32.totalorder %s129, %s131
      %p138 = scmp.eq.s32.totalorder %s21, 1
      %p139 = por %p137, %p138
      %p140 = scmp.ne.s32.totalorder %s131, %s132
      %p141 = scmp.eq.s32.totalorder %s21, 0
      %p142 = por %p140, %p141
      %p143 = scmp.ne.s32.totalorder %s131, %s132
      %p144 = scmp.eq.s32.totalorder %s22, 1
      %p145 = por %p143, %p144
      %p147 = scmp.ne.s32.totalorder %s132, %s146
      %p148 = scmp.eq.s32.totalorder %s22, 0
      %p149 = por %p147, %p148
      %s150 = ssub.s32 %s16, %s23
      %p151 = scmp.eq.s32.totalorder %s150, 0
      %s153 = sadd.s32 %s152, 1
      %s154 = scalar_select %p151, %s152, %s153
      %p157 = pneg %p151
      %p158 = scmp.eq.s32.totalorder %s16, 1
      %p159 = por %p157, %p158
      %p160 = scmp.ne.s32.totalorder %s152, %s155
      %p161 = scmp.eq.s32.totalorder %s16, 0
      %p162 = por %p160, %p161
      %p163 = scmp.ne.s32.totalorder %s152, %s155
      %p164 = scmp.eq.s32.totalorder %s21, 1
      %p165 = por %p163, %p164
      %p166 = scmp.ne.s32.totalorder %s155, %s156
      %p167 = scmp.eq.s32.totalorder %s21, 0
      %p168 = por %p166, %p167
      %p169 = scmp.ne.s32.totalorder %s155, %s156
      %p170 = scmp.eq.s32.totalorder %s22, 1
      %p171 = por %p169, %p170
      %p173 = scmp.ne.s32.totalorder %s156, %s172
      %p174 = scmp.eq.s32.totalorder %s22, 0
      %p175 = por %p173, %p174
      %s176 = ssub.s32 %s16, %s23
      %p177 = scmp.eq.s32.totalorder %s176, 0
      %s179 = sadd.s32 %s178, 1
      %s180 = scalar_select %p177, %s178, %s179
      %p183 = pneg %p177
      %p184 = scmp.eq.s32.totalorder %s16, 1
      %p185 = por %p183, %p184
      %p186 = scmp.ne.s32.totalorder %s178, %s181
      %p187 = scmp.eq.s32.totalorder %s16, 0
      %p188 = por %p186, %p187
      %p189 = scmp.ne.s32.totalorder %s178, %s181
      %p190 = scmp.eq.s32.totalorder %s21, 1
      %p191 = por %p189, %p190
      %p192 = scmp.ne.s32.totalorder %s181, %s182
      %p193 = scmp.eq.s32.totalorder %s21, 0
      %p194 = por %p192, %p193
      %p195 = scmp.ne.s32.totalorder %s181, %s182
      %p196 = scmp.eq.s32.totalorder %s22, 1
      %p197 = por %p195, %p196
      %p199 = scmp.ne.s32.totalorder %s182, %s198
      %p200 = scmp.eq.s32.totalorder %s22, 0
      %p201 = por %p199, %p200
      %p202 = scmp.le.s32.totalorder 1, %s16
      %p203 = scmp.lt.s32.totalorder %s16, 3
      %p204 = pnand %p202, %p203
      %p205 = pneg %p204
      // Predicated region
      $region9: #{tpu_custom_call.1} parent=5 // pred_check
        _
      $region10: #{tpu_custom_call.1} parent=5 // pred_check_branch
        %207 = sbr.rel (%p204) target = $region12
      $region11: #{tpu_custom_call.1} parent=5 // pred_region
        %s208 = ssub.s32 %s16, 1
        // Predicated region
        $region13: #{tpu_custom_call.1} parent=11 // pred_check
          %p209 = pneg %p37
        $region14: #{tpu_custom_call.1} parent=11 // pred_check_branch
          %211 = sbr.rel (%p209) target = $region16
        $region15: #{tpu_custom_call.1} parent=11 // pred_region
          _
        $region16: #{tpu_custom_call.1} parent=11 // pred_fallthru
          _
        // Predicated region
        $region17: #{tpu_custom_call.1} parent=11 // pred_check
          %p212 = pneg %p58
        $region18: #{tpu_custom_call.1} parent=11 // pred_check_branch
          %214 = sbr.rel (%p212) target = $region20
        $region19: #{tpu_custom_call.1} parent=11 // pred_region
          _
        $region20: #{tpu_custom_call.1} parent=11 // pred_fallthru
          _
        // Predicated region
        $region21: #{tpu_custom_call.1} parent=11 // pred_check
          %p215 = pneg %p79
        $region22: #{tpu_custom_call.1} parent=11 // pred_check_branch
          %217 = sbr.rel (%p215) target = $region24
        $region23: #{tpu_custom_call.1} parent=11 // pred_region
          _
        $region24: #{tpu_custom_call.1} parent=11 // pred_fallthru
          _
        // Predicated region
        $region25: #{tpu_custom_call.1} parent=11 // pred_check
          %p218 = pneg %p100
        $region26: #{tpu_custom_call.1} parent=11 // pred_check_branch
          %220 = sbr.rel (%p218) target = $region28
        $region27: #{tpu_custom_call.1} parent=11 // pred_region
          _
        $region28: #{tpu_custom_call.1} parent=11 // pred_fallthru
          _
        // Predicated region
        $region29: #{tpu_custom_call.1} parent=11 // pred_check
          %p221 = pneg %p121
        $region30: #{tpu_custom_call.1} parent=11 // pred_check_branch
          %223 = sbr.rel (%p221) target = $region32
        $region31: #{tpu_custom_call.1} parent=11 // pred_region
          _
        $region32: #{tpu_custom_call.1} parent=11 // pred_fallthru
          _
        // Predicated region
        $region33: #{tpu_custom_call.1} parent=11 // pred_check
          %p224 = pneg %p142
        $region34: #{tpu_custom_call.1} parent=11 // pred_check_branch
          %226 = sbr.rel (%p224) target = $region36
        $region35: #{tpu_custom_call.1} parent=11 // pred_region
          _
        $region36: #{tpu_custom_call.1} parent=11 // pred_fallthru
          _
      $region12: #{tpu_custom_call.1} parent=5 // pred_fallthru
        _
      %p227 = scmp.lt.s32.totalorder %s16, 2
      // Predicated region
      $region37: #{tpu_custom_call.1} parent=5 // pred_check
        %p228 = pneg %p227
      $region38: #{tpu_custom_call.1} parent=5 // pred_check_branch
        %230 = sbr.rel (%p228) target = $region40
      $region39: #{tpu_custom_call.1} parent=5 // pred_region
        // Predicated region
        $region41: #{tpu_custom_call.1} parent=39 // pred_check
          %p231 = pneg %p162
        $region42: #{tpu_custom_call.1} parent=39 // pred_check_branch
          %233 = sbr.rel (%p231) target = $region44
        $region43: #{tpu_custom_call.1} parent=39 // pred_region
          %s234 = smul.u32 16, %s16
          %p235 = scmp.lt.s32.totalorder %s234, 31
          %s236 = scalar_select %p235, %s234, 31
          %s237 = smul.addr %s236, 8
          %s238 = scalar_lea.vmem %s6, %s237
          %s239 = smul.u32 16, %s16
        $region44: #{tpu_custom_call.1} parent=39 // pred_fallthru
          _
      $region40: #{tpu_custom_call.1} parent=5 // pred_fallthru
        _
      %p240 = scmp.le.s32.totalorder 1, %s16
      %p241 = scmp.lt.s32.totalorder %s16, 3
      %p242 = pnand %p240, %p241
      %p243 = pneg %p242
      // Predicated region
      $region45: #{tpu_custom_call.1} parent=5 // pred_check
        _
      $region46: #{tpu_custom_call.1} parent=5 // pred_check_branch
        %245 = sbr.rel (%p242) target = $region48
      $region47: #{tpu_custom_call.1} parent=5 // pred_region
        %s246 = ssub.s32 %s16, 1
        %p247 = pneg %p37
        %p248 = pneg %p34
        %p249 = pneg %p58
        %p250 = pneg %p55
        %p251 = pneg %p79
        %p252 = pneg %p76
        %p253 = pneg %p100
        %p254 = pneg %p97
        %p255 = pneg %p121
        %p256 = pneg %p118
        %p257 = pneg %p142
        %p258 = pneg %p139
        %s259 = smul.u32 16, %s21
        %p260 = scmp.lt.s32.totalorder %s259, 31
        %s261 = scalar_select %p260, %s259, 31
        %s262 = smul.addr %s261, 8
        %s263 = scalar_lea.vmem %s6, %s262
        %p264 = pneg %p168
        %p265 = pneg %p165
        %p266 = pneg %p194
        %p267 = pneg %p191
        %s268 = sand.u32 %s181, 1
        %s269 = scalar_lea.sflag [#allocation3], %s268
        %s270 = sand.u32 %s181, 1
        %s271 = smul.addr %s270, 8
        %s272 = scalar_lea.vmem [#allocation2], %s271
        %s273 = smul.u32 16, %s21
        %p274 = scmp.lt.s32.totalorder %s273, 31
        %s275 = scalar_select %p274, %s273, 31
        %s276 = smul.addr %s275, 8
        %s277 = scalar_lea.vmem %s6, %s276
        %s278 = smul.u32 16, %s21
        %v279 = vld [vmem:[%s0] sm:$0xff]
        %v280 = vld [vmem:[%s0 + $0x8] sm:$0xff]
        %v281 = vld [vmem:[%s0 + $0x10] sm:$0xff]
        %v282 = vld [vmem:[%s0 + $0x18] sm:$0xff]
        %v283 = vld [vmem:[%s277] sm:$0xff]
        %v284 = vld [vmem:[%s277 + $0x8] sm:$0xff]
        %v285 = vld [vmem:[%s277 + $0x10] sm:$0xff]
        %v286 = vld [vmem:[%s277 + $0x18] sm:$0xff]
        %v287 = vld [vmem:[%s277 + $0x20] sm:$0xff]
        %v288 = vld [vmem:[%s277 + $0x28] sm:$0xff]
        %v289 = vld [vmem:[%s277 + $0x30] sm:$0xff]
        %v290 = vld [vmem:[%s277 + $0x38] sm:$0xff]
        %v291 = vld [vmem:[%s277 + $0x40] sm:$0xff]
        %v292 = vld [vmem:[%s277 + $0x48] sm:$0xff]
        %v293 = vld [vmem:[%s277 + $0x50] sm:$0xff]
        %v294 = vld [vmem:[%s277 + $0x58] sm:$0xff]
        %v295 = vld [vmem:[%s277 + $0x60] sm:$0xff]
        %v296 = vld [vmem:[%s277 + $0x68] sm:$0xff]
        %v297 = vld [vmem:[%s277 + $0x70] sm:$0xff]
        %v298 = vld [vmem:[%s277 + $0x78] sm:$0xff]
        %v299 = vld [vmem:[%s1] sm:$0xff]
        %v300 = vld [vmem:[%s1 + $0x8] sm:$0xff]
        %v301 = vld [vmem:[%s1 + $0x10] sm:$0xff]
        %v302 = vld [vmem:[%s1 + $0x18] sm:$0xff]
        %304 = vset.pattern.permute.xlu0 0
        %305 = vperm.xlu0 %304, %v299
        %v306 = vpop.permute.xlu0 %305
        %309 = vset.pattern.permute.xlu0 0
        %310 = vperm.xlu0 %309, %v300
        %v311 = vpop.permute.xlu0 %310
        %314 = vset.pattern.permute.xlu0 0
        %315 = vperm.xlu0 %314, %v301
        %v316 = vpop.permute.xlu0 %315
        %319 = vset.pattern.permute.xlu0 0
        %320 = vperm.xlu0 %319, %v302
        %v321 = vpop.permute.xlu0 %320
        %vm323 = vcmask 130048
        %v325 = vsel %vm323, %v279, 0
        %v328 = vsel %vm323, %v280, 0
        %v331 = vsel %vm323, %v281, 0
        %v334 = vsel %vm323, %v282, 0
        %v337 = vsel %vm323, %v283, 0
        %v340 = vsel %vm323, %v284, 0
        %v343 = vsel %vm323, %v285, 0
        %v346 = vsel %vm323, %v286, 0
        %v349 = vsel %vm323, %v287, 0
        %v352 = vsel %vm323, %v288, 0
        %v355 = vsel %vm323, %v289, 0
        %v358 = vsel %vm323, %v290, 0
        %v361 = vsel %vm323, %v291, 0
        %v364 = vsel %vm323, %v292, 0
        %v367 = vsel %vm323, %v293, 0
        %v370 = vsel %vm323, %v294, 0
        %v373 = vsel %vm323, %v295, 0
        %v376 = vsel %vm323, %v296, 0
        %v379 = vsel %vm323, %v297, 0
        %v382 = vsel %vm323, %v298, 0
        %384 = vmatprep.subr.mxu0 0.0
        %v385 = vand.u32 %v382, 4294901760
        %386 = vmatpush1.xpose.msra.mxu0 %v385
        %387 = vmatprep.subr.mxu0 0.0
        %v388 = vand.u32 %v379, 4294901760
        %389 = vmatpush1.xpose.msra.mxu0 %v388
        %390 = vmatprep.subr.mxu0 0.0
        %v391 = vand.u32 %v376, 4294901760
        %392 = vmatpush1.xpose.msra.mxu0 %v391
        %393 = vmatprep.subr.mxu0 0.0
        %v394 = vand.u32 %v373, 4294901760
        %395 = vmatpush1.xpose.msra.mxu0 %v394
        %396 = vmatprep.subr.mxu0 0.0
        %v397 = vand.u32 %v370, 4294901760
        %398 = vmatpush1.xpose.msra.mxu0 %v397
        %399 = vmatprep.subr.mxu0 0.0
        %v400 = vand.u32 %v367, 4294901760
        %401 = vmatpush1.xpose.msra.mxu0 %v400
        %402 = vmatprep.subr.mxu0 0.0
        %v403 = vand.u32 %v364, 4294901760
        %404 = vmatpush1.xpose.msra.mxu0 %v403
        %405 = vmatprep.subr.mxu0 0.0
        %v406 = vand.u32 %v361, 4294901760
        %407 = vmatpush1.xpose.msra.mxu0 %v406
        %408 = vmatprep.subr.mxu0 0.0
        %v409 = vand.u32 %v358, 4294901760
        %410 = vmatpush1.xpose.msra.mxu0 %v409
        %411 = vmatprep.subr.mxu0 0.0
        %v412 = vand.u32 %v355, 4294901760
        %413 = vmatpush1.xpose.msra.mxu0 %v412
        %414 = vmatprep.subr.mxu0 0.0
        %v415 = vand.u32 %v352, 4294901760
        %416 = vmatpush1.xpose.msra.mxu0 %v415
        %417 = vmatprep.subr.mxu0 0.0
        %v418 = vand.u32 %v349, 4294901760
        %419 = vmatpush1.xpose.msra.mxu0 %v418
        %420 = vmatprep.subr.mxu0 0.0
        %v421 = vand.u32 %v346, 4294901760
        %422 = vmatpush1.xpose.msra.mxu0 %v421
        %423 = vmatprep.subr.mxu0 0.0
        %v424 = vand.u32 %v343, 4294901760
        %425 = vmatpush1.xpose.msra.mxu0 %v424
        %426 = vmatprep.subr.mxu0 0.0
        %v427 = vand.u32 %v340, 4294901760
        %428 = vmatpush1.xpose.msra.mxu0 %v427
        %429 = vmatprep.subr.mxu0 0.0
        %v430 = vand.u32 %v337, 4294901760
        %431 = vmatpush1.xpose.msra.mxu0 %v430
        %432 = vmatprep.subr.mxu0 0.0
        %433 = vmatpush2.xpose.msra.mxu0 0.0
        %434 = vmatprep.subr.mxu0 0.0
        %435 = vmatpush2.xpose.msra.mxu0 0.0
        %436 = vmatprep.subr.mxu0 0.0
        %437 = vmatpush2.xpose.msra.mxu0 0.0
        %438 = vmatprep.subr.mxu0 0.0
        %439 = vmatpush2.xpose.msra.mxu0 0.0
        %440 = vmatprep.subr.mxu0 0.0
        %441 = vmatpush2.xpose.msra.mxu0 0.0
        %442 = vmatprep.subr.mxu0 0.0
        %443 = vmatpush2.xpose.msra.mxu0 0.0
        %444 = vmatprep.subr.mxu0 0.0
        %445 = vmatpush2.xpose.msra.mxu0 0.0
        %446 = vmatprep.subr.mxu0 0.0
        %447 = vmatpush2.xpose.msra.mxu0 0.0
        %448 = vmatprep.subr.mxu0 0.0
        %449 = vmatpush2.xpose.msra.mxu0 0.0
        %450 = vmatprep.subr.mxu0 0.0
        %451 = vmatpush2.xpose.msra.mxu0 0.0
        %452 = vmatprep.subr.mxu0 0.0
        %453 = vmatpush2.xpose.msra.mxu0 0.0
        %454 = vmatprep.subr.mxu0 0.0
        %455 = vmatpush2.xpose.msra.mxu0 0.0
        %456 = vmatprep.subr.mxu0 0.0
        %457 = vmatpush2.xpose.msra.mxu0 0.0
        %458 = vmatprep.subr.mxu0 0.0
        %459 = vmatpush2.xpose.msra.mxu0 0.0
        %460 = vmatprep.subr.mxu0 0.0
        %461 = vmatpush2.xpose.msra.mxu0 0.0
        %462 = vmatprep.subr.mxu0 0.0
        %463 = vmatpush2.xpose.msra.mxu0 0.0
        %464 = vmatprep.mubr.f32.mxu0 0.0
        %v465 = vand.u32 %v325, 4294901760
        %v466 = vsub.f32 %v325, %v465
        %v467 = vand.u32 %v466, 4294901760
        %v468 = vsub.f32 %v466, %v467
        %v469 = vand.u32 %v468, 4294901760
        %470 = vmatmul.mubr.f32.gmra.mxu0 %v469
        %v471 = vpop.f32.mrf.mxu0
        %v472 = vadd.f32 %v306, %v471
        %v473 = vpop.f32.mrf.mxu0
        %474 = vmatprep.mubr.f32.mxu0 0.0
        %v475 = vand.u32 %v328, 4294901760
        %v476 = vsub.f32 %v328, %v475
        %v477 = vand.u32 %v476, 4294901760
        %v478 = vsub.f32 %v476, %v477
        %v479 = vand.u32 %v478, 4294901760
        %480 = vmatmul.mubr.f32.gmra.mxu0 %v479
        %v481 = vpop.f32.mrf.mxu0
        %v482 = vadd.f32 %v311, %v481
        %v483 = vpop.f32.mrf.mxu0
        %484 = vmatprep.mubr.f32.mxu0 0.0
        %v485 = vand.u32 %v331, 4294901760
        %v486 = vsub.f32 %v331, %v485
        %v487 = vand.u32 %v486, 4294901760
        %v488 = vsub.f32 %v486, %v487
        %v489 = vand.u32 %v488, 4294901760
        %490 = vmatmul.mubr.f32.gmra.mxu0 %v489
        %v491 = vpop.f32.mrf.mxu0
        %v492 = vadd.f32 %v316, %v491
        %v493 = vpop.f32.mrf.mxu0
        %494 = vmatprep.mubr.f32.mxu0 0.0
        %v495 = vand.u32 %v334, 4294901760
        %v496 = vsub.f32 %v334, %v495
        %v497 = vand.u32 %v496, 4294901760
        %v498 = vsub.f32 %v496, %v497
        %v499 = vand.u32 %v498, 4294901760
        %500 = vmatmul.mubr.f32.gmra.mxu0 %v499
        %v501 = vpop.f32.mrf.mxu0
        %v502 = vadd.f32 %v321, %v501
        %v503 = vpop.f32.mrf.mxu0
        %504 = vdwg.mxu0
        %505 = vmatprep.subr.mxu0 0.0
        %v506 = vand.u32 %v382, 4294901760
        %v507 = vsub.f32 %v382, %v506
        %v508 = vand.u32 %v507, 4294901760
        %v509 = vsub.f32 %v507, %v508
        %v510 = vand.u32 %v509, 4294901760
        %511 = vmatpush1.xpose.msra.mxu0 %v510
        %512 = vmatprep.subr.mxu0 0.0
        %v513 = vand.u32 %v379, 4294901760
        %v514 = vsub.f32 %v379, %v513
        %v515 = vand.u32 %v514, 4294901760
        %v516 = vsub.f32 %v514, %v515
        %v517 = vand.u32 %v516, 4294901760
        %518 = vmatpush1.xpose.msra.mxu0 %v517
        %519 = vmatprep.subr.mxu0 0.0
        %v520 = vand.u32 %v376, 4294901760
        %v521 = vsub.f32 %v376, %v520
        %v522 = vand.u32 %v521, 4294901760
        %v523 = vsub.f32 %v521, %v522
        %v524 = vand.u32 %v523, 4294901760
        %525 = vmatpush1.xpose.msra.mxu0 %v524
        %526 = vmatprep.subr.mxu0 0.0
        %v527 = vand.u32 %v373, 4294901760
        %v528 = vsub.f32 %v373, %v527
        %v529 = vand.u32 %v528, 4294901760
        %v530 = vsub.f32 %v528, %v529
        %v531 = vand.u32 %v530, 4294901760
        %532 = vmatpush1.xpose.msra.mxu0 %v531
        %533 = vmatprep.subr.mxu0 0.0
        %v534 = vand.u32 %v370, 4294901760
        %v535 = vsub.f32 %v370, %v534
        %v536 = vand.u32 %v535, 4294901760
        %v537 = vsub.f32 %v535, %v536
        %v538 = vand.u32 %v537, 4294901760
        %539 = vmatpush1.xpose.msra.mxu0 %v538
        %540 = vmatprep.subr.mxu0 0.0
        %v541 = vand.u32 %v367, 4294901760
        %v542 = vsub.f32 %v367, %v541
        %v543 = vand.u32 %v542, 4294901760
        %v544 = vsub.f32 %v542, %v543
        %v545 = vand.u32 %v544, 4294901760
        %546 = vmatpush1.xpose.msra.mxu0 %v545
        %547 = vmatprep.subr.mxu0 0.0
        %v548 = vand.u32 %v364, 4294901760
        %v549 = vsub.f32 %v364, %v548
        %v550 = vand.u32 %v549, 4294901760
        %v551 = vsub.f32 %v549, %v550
        %v552 = vand.u32 %v551, 4294901760
        %553 = vmatpush1.xpose.msra.mxu0 %v552
        %554 = vmatprep.subr.mxu0 0.0
        %v555 = vand.u32 %v361, 4294901760
        %v556 = vsub.f32 %v361, %v555
        %v557 = vand.u32 %v556, 4294901760
        %v558 = vsub.f32 %v556, %v557
        %v559 = vand.u32 %v558, 4294901760
        %560 = vmatpush1.xpose.msra.mxu0 %v559
        %561 = vmatprep.subr.mxu0 0.0
        %v562 = vand.u32 %v358, 4294901760
        %v563 = vsub.f32 %v358, %v562
        %v564 = vand.u32 %v563, 4294901760
        %v565 = vsub.f32 %v563, %v564
        %v566 = vand.u32 %v565, 4294901760
        %567 = vmatpush1.xpose.msra.mxu0 %v566
        %568 = vmatprep.subr.mxu0 0.0
        %v569 = vand.u32 %v355, 4294901760
        %v570 = vsub.f32 %v355, %v569
        %v571 = vand.u32 %v570, 4294901760
        %v572 = vsub.f32 %v570, %v571
        %v573 = vand.u32 %v572, 4294901760
        %574 = vmatpush1.xpose.msra.mxu0 %v573
        %575 = vmatprep.subr.mxu0 0.0
        %v576 = vand.u32 %v352, 4294901760
        %v577 = vsub.f32 %v352, %v576
        %v578 = vand.u32 %v577, 4294901760
        %v579 = vsub.f32 %v577, %v578
        %v580 = vand.u32 %v579, 4294901760
        %581 = vmatpush1.xpose.msra.mxu0 %v580
        %582 = vmatprep.subr.mxu0 0.0
        %v583 = vand.u32 %v349, 4294901760
        %v584 = vsub.f32 %v349, %v583
        %v585 = vand.u32 %v584, 4294901760
        %v586 = vsub.f32 %v584, %v585
        %v587 = vand.u32 %v586, 4294901760
        %588 = vmatpush1.xpose.msra.mxu0 %v587
        %589 = vmatprep.subr.mxu0 0.0
        %v590 = vand.u32 %v346, 4294901760
        %v591 = vsub.f32 %v346, %v590
        %v592 = vand.u32 %v591, 4294901760
        %v593 = vsub.f32 %v591, %v592
        %v594 = vand.u32 %v593, 4294901760
        %595 = vmatpush1.xpose.msra.mxu0 %v594
        %596 = vmatprep.subr.mxu0 0.0
        %v597 = vand.u32 %v343, 4294901760
        %v598 = vsub.f32 %v343, %v597
        %v599 = vand.u32 %v598, 4294901760
        %v600 = vsub.f32 %v598, %v599
        %v601 = vand.u32 %v600, 4294901760
        %602 = vmatpush1.xpose.msra.mxu0 %v601
        %603 = vmatprep.subr.mxu0 0.0
        %v604 = vand.u32 %v340, 4294901760
        %v605 = vsub.f32 %v340, %v604
        %v606 = vand.u32 %v605, 4294901760
        %v607 = vsub.f32 %v605, %v606
        %v608 = vand.u32 %v607, 4294901760
        %609 = vmatpush1.xpose.msra.mxu0 %v608
        %610 = vmatprep.subr.mxu0 0.0
        %v611 = vand.u32 %v337, 4294901760
        %v612 = vsub.f32 %v337, %v611
        %v613 = vand.u32 %v612, 4294901760
        %v614 = vsub.f32 %v612, %v613
        %v615 = vand.u32 %v614, 4294901760
        %616 = vmatpush1.xpose.msra.mxu0 %v615
        %617 = vmatprep.subr.mxu0 0.0
        %618 = vmatpush2.xpose.msra.mxu0 0.0
        %619 = vmatprep.subr.mxu0 0.0
        %620 = vmatpush2.xpose.msra.mxu0 0.0
        %621 = vmatprep.subr.mxu0 0.0
        %622 = vmatpush2.xpose.msra.mxu0 0.0
        %623 = vmatprep.subr.mxu0 0.0
        %624 = vmatpush2.xpose.msra.mxu0 0.0
        %625 = vmatprep.subr.mxu0 0.0
        %626 = vmatpush2.xpose.msra.mxu0 0.0
        %627 = vmatprep.subr.mxu0 0.0
        %628 = vmatpush2.xpose.msra.mxu0 0.0
        %629 = vmatprep.subr.mxu0 0.0
        %630 = vmatpush2.xpose.msra.mxu0 0.0
        %631 = vmatprep.subr.mxu0 0.0
        %632 = vmatpush2.xpose.msra.mxu0 0.0
        %633 = vmatprep.subr.mxu0 0.0
        %634 = vmatpush2.xpose.msra.mxu0 0.0
        %635 = vmatprep.subr.mxu0 0.0
        %636 = vmatpush2.xpose.msra.mxu0 0.0
        %637 = vmatprep.subr.mxu0 0.0
        %638 = vmatpush2.xpose.msra.mxu0 0.0
        %639 = vmatprep.subr.mxu0 0.0
        %640 = vmatpush2.xpose.msra.mxu0 0.0
        %641 = vmatprep.subr.mxu0 0.0
        %642 = vmatpush2.xpose.msra.mxu0 0.0
        %643 = vmatprep.subr.mxu0 0.0
        %644 = vmatpush2.xpose.msra.mxu0 0.0
        %645 = vmatprep.subr.mxu0 0.0
        %646 = vmatpush2.xpose.msra.mxu0 0.0
        %647 = vmatprep.subr.mxu0 0.0
        %648 = vmatpush2.xpose.msra.mxu0 0.0
        %649 = vmatprep.mubr.f32.mxu0 0.0
        %v650 = vand.u32 %v325, 4294901760
        %651 = vmatmul.mubr.f32.gmra.mxu0 %v650
        %v652 = vpop.f32.mrf.mxu0
        %v653 = vadd.f32 %v472, %v652
        %v654 = vpop.f32.mrf.mxu0
        %655 = vmatprep.mubr.f32.mxu0 0.0
        %v656 = vand.u32 %v328, 4294901760
        %657 = vmatmul.mubr.f32.gmra.mxu0 %v656
        %v658 = vpop.f32.mrf.mxu0
        %v659 = vadd.f32 %v482, %v658
        %v660 = vpop.f32.mrf.mxu0
        %661 = vmatprep.mubr.f32.mxu0 0.0
        %v662 = vand.u32 %v331, 4294901760
        %663 = vmatmul.mubr.f32.gmra.mxu0 %v662
        %v664 = vpop.f32.mrf.mxu0
        %v665 = vadd.f32 %v492, %v664
        %v666 = vpop.f32.mrf.mxu0
        %667 = vmatprep.mubr.f32.mxu0 0.0
        %v668 = vand.u32 %v334, 4294901760
        %669 = vmatmul.mubr.f32.gmra.mxu0 %v668
        %v670 = vpop.f32.mrf.mxu0
        %v671 = vadd.f32 %v502, %v670
        %v672 = vpop.f32.mrf.mxu0
        %673 = vdwg.mxu0
        %674 = vmatprep.subr.mxu0 0.0
        %v675 = vand.u32 %v382, 4294901760
        %v676 = vsub.f32 %v382, %v675
        %677 = vmatpush1.xpose.msra.mxu0 %v676
        %678 = vmatprep.subr.mxu0 0.0
        %v679 = vand.u32 %v379, 4294901760
        %v680 = vsub.f32 %v379, %v679
        %681 = vmatpush1.xpose.msra.mxu0 %v680
        %682 = vmatprep.subr.mxu0 0.0
        %v683 = vand.u32 %v376, 4294901760
        %v684 = vsub.f32 %v376, %v683
        %685 = vmatpush1.xpose.msra.mxu0 %v684
        %686 = vmatprep.subr.mxu0 0.0
        %v687 = vand.u32 %v373, 4294901760
        %v688 = vsub.f32 %v373, %v687
        %689 = vmatpush1.xpose.msra.mxu0 %v688
        %690 = vmatprep.subr.mxu0 0.0
        %v691 = vand.u32 %v370, 4294901760
        %v692 = vsub.f32 %v370, %v691
        %693 = vmatpush1.xpose.msra.mxu0 %v692
        %694 = vmatprep.subr.mxu0 0.0
        %v695 = vand.u32 %v367, 4294901760
        %v696 = vsub.f32 %v367, %v695
        %697 = vmatpush1.xpose.msra.mxu0 %v696
        %698 = vmatprep.subr.mxu0 0.0
        %v699 = vand.u32 %v364, 4294901760
        %v700 = vsub.f32 %v364, %v699
        %701 = vmatpush1.xpose.msra.mxu0 %v700
        %702 = vmatprep.subr.mxu0 0.0
        %v703 = vand.u32 %v361, 4294901760
        %v704 = vsub.f32 %v361, %v703
        %705 = vmatpush1.xpose.msra.mxu0 %v704
        %706 = vmatprep.subr.mxu0 0.0
        %v707 = vand.u32 %v358, 4294901760
        %v708 = vsub.f32 %v358, %v707
        %709 = vmatpush1.xpose.msra.mxu0 %v708
        %710 = vmatprep.subr.mxu0 0.0
        %v711 = vand.u32 %v355, 4294901760
        %v712 = vsub.f32 %v355, %v711
        %713 = vmatpush1.xpose.msra.mxu0 %v712
        %714 = vmatprep.subr.mxu0 0.0
        %v715 = vand.u32 %v352, 4294901760
        %v716 = vsub.f32 %v352, %v715
        %717 = vmatpush1.xpose.msra.mxu0 %v716
        %718 = vmatprep.subr.mxu0 0.0
        %v719 = vand.u32 %v349, 4294901760
        %v720 = vsub.f32 %v349, %v719
        %721 = vmatpush1.xpose.msra.mxu0 %v720
        %722 = vmatprep.subr.mxu0 0.0
        %v723 = vand.u32 %v346, 4294901760
        %v724 = vsub.f32 %v346, %v723
        %725 = vmatpush1.xpose.msra.mxu0 %v724
        %726 = vmatprep.subr.mxu0 0.0
        %v727 = vand.u32 %v343, 4294901760
        %v728 = vsub.f32 %v343, %v727
        %729 = vmatpush1.xpose.msra.mxu0 %v728
        %730 = vmatprep.subr.mxu0 0.0
        %v731 = vand.u32 %v340, 4294901760
        %v732 = vsub.f32 %v340, %v731
        %733 = vmatpush1.xpose.msra.mxu0 %v732
        %734 = vmatprep.subr.mxu0 0.0
        %v735 = vand.u32 %v337, 4294901760
        %v736 = vsub.f32 %v337, %v735
        %737 = vmatpush1.xpose.msra.mxu0 %v736
        %738 = vmatprep.subr.mxu0 0.0
        %739 = vmatpush2.xpose.msra.mxu0 0.0
        %740 = vmatprep.subr.mxu0 0.0
        %741 = vmatpush2.xpose.msra.mxu0 0.0
        %742 = vmatprep.subr.mxu0 0.0
        %743 = vmatpush2.xpose.msra.mxu0 0.0
        %744 = vmatprep.subr.mxu0 0.0
        %745 = vmatpush2.xpose.msra.mxu0 0.0
        %746 = vmatprep.subr.mxu0 0.0
        %747 = vmatpush2.xpose.msra.mxu0 0.0
        %748 = vmatprep.subr.mxu0 0.0
        %749 = vmatpush2.xpose.msra.mxu0 0.0
        %750 = vmatprep.subr.mxu0 0.0
        %751 = vmatpush2.xpose.msra.mxu0 0.0
        %752 = vmatprep.subr.mxu0 0.0
        %753 = vmatpush2.xpose.msra.mxu0 0.0
        %754 = vmatprep.subr.mxu0 0.0
        %755 = vmatpush2.xpose.msra.mxu0 0.0
        %756 = vmatprep.subr.mxu0 0.0
        %757 = vmatpush2.xpose.msra.mxu0 0.0
        %758 = vmatprep.subr.mxu0 0.0
        %759 = vmatpush2.xpose.msra.mxu0 0.0
        %760 = vmatprep.subr.mxu0 0.0
        %761 = vmatpush2.xpose.msra.mxu0 0.0
        %762 = vmatprep.subr.mxu0 0.0
        %763 = vmatpush2.xpose.msra.mxu0 0.0
        %764 = vmatprep.subr.mxu0 0.0
        %765 = vmatpush2.xpose.msra.mxu0 0.0
        %766 = vmatprep.subr.mxu0 0.0
        %767 = vmatpush2.xpose.msra.mxu0 0.0
        %768 = vmatprep.subr.mxu0 0.0
        %769 = vmatpush2.xpose.msra.mxu0 0.0
        %770 = vmatprep.mubr.f32.mxu0 0.0
        %v771 = vand.u32 %v325, 4294901760
        %v772 = vsub.f32 %v325, %v771
        %773 = vmatmul.mubr.f32.gmra.mxu0 %v772
        %v774 = vpop.f32.mrf.mxu0
        %v775 = vadd.f32 %v653, %v774
        %v776 = vpop.f32.mrf.mxu0
        %777 = vmatprep.mubr.f32.mxu0 0.0
        %v778 = vand.u32 %v328, 4294901760
        %v779 = vsub.f32 %v328, %v778
        %780 = vmatmul.mubr.f32.gmra.mxu0 %v779
        %v781 = vpop.f32.mrf.mxu0
        %v782 = vadd.f32 %v659, %v781
        %v783 = vpop.f32.mrf.mxu0
        %784 = vmatprep.mubr.f32.mxu0 0.0
        %v785 = vand.u32 %v331, 4294901760
        %v786 = vsub.f32 %v331, %v785
        %787 = vmatmul.mubr.f32.gmra.mxu0 %v786
        %v788 = vpop.f32.mrf.mxu0
        %v789 = vadd.f32 %v665, %v788
        %v790 = vpop.f32.mrf.mxu0
        %791 = vmatprep.mubr.f32.mxu0 0.0
        %v792 = vand.u32 %v334, 4294901760
        %v793 = vsub.f32 %v334, %v792
        %794 = vmatmul.mubr.f32.gmra.mxu0 %v793
        %v795 = vpop.f32.mrf.mxu0
        %v796 = vadd.f32 %v671, %v795
        %v797 = vpop.f32.mrf.mxu0
        %798 = vdwg.mxu0
        %799 = vmatprep.subr.mxu0 0.0
        %v800 = vand.u32 %v382, 4294901760
        %801 = vmatpush1.xpose.msra.mxu0 %v800
        %802 = vmatprep.subr.mxu0 0.0
        %v803 = vand.u32 %v379, 4294901760
        %804 = vmatpush1.xpose.msra.mxu0 %v803
        %805 = vmatprep.subr.mxu0 0.0
        %v806 = vand.u32 %v376, 4294901760
        %807 = vmatpush1.xpose.msra.mxu0 %v806
        %808 = vmatprep.subr.mxu0 0.0
        %v809 = vand.u32 %v373, 4294901760
        %810 = vmatpush1.xpose.msra.mxu0 %v809
        %811 = vmatprep.subr.mxu0 0.0
        %v812 = vand.u32 %v370, 4294901760
        %813 = vmatpush1.xpose.msra.mxu0 %v812
        %814 = vmatprep.subr.mxu0 0.0
        %v815 = vand.u32 %v367, 4294901760
        %816 = vmatpush1.xpose.msra.mxu0 %v815
        %817 = vmatprep.subr.mxu0 0.0
        %v818 = vand.u32 %v364, 4294901760
        %819 = vmatpush1.xpose.msra.mxu0 %v818
        %820 = vmatprep.subr.mxu0 0.0
        %v821 = vand.u32 %v361, 4294901760
        %822 = vmatpush1.xpose.msra.mxu0 %v821
        %823 = vmatprep.subr.mxu0 0.0
        %v824 = vand.u32 %v358, 4294901760
        %825 = vmatpush1.xpose.msra.mxu0 %v824
        %826 = vmatprep.subr.mxu0 0.0
        %v827 = vand.u32 %v355, 4294901760
        %828 = vmatpush1.xpose.msra.mxu0 %v827
        %829 = vmatprep.subr.mxu0 0.0
        %v830 = vand.u32 %v352, 4294901760
        %831 = vmatpush1.xpose.msra.mxu0 %v830
        %832 = vmatprep.subr.mxu0 0.0
        %v833 = vand.u32 %v349, 4294901760
        %834 = vmatpush1.xpose.msra.mxu0 %v833
        %835 = vmatprep.subr.mxu0 0.0
        %v836 = vand.u32 %v346, 4294901760
        %837 = vmatpush1.xpose.msra.mxu0 %v836
        %838 = vmatprep.subr.mxu0 0.0
        %v839 = vand.u32 %v343, 4294901760
        %840 = vmatpush1.xpose.msra.mxu0 %v839
        %841 = vmatprep.subr.mxu0 0.0
        %v842 = vand.u32 %v340, 4294901760
        %843 = vmatpush1.xpose.msra.mxu0 %v842
        %844 = vmatprep.subr.mxu0 0.0
        %v845 = vand.u32 %v337, 4294901760
        %846 = vmatpush1.xpose.msra.mxu0 %v845
        %847 = vmatprep.subr.mxu0 0.0
        %848 = vmatpush2.xpose.msra.mxu0 0.0
        %849 = vmatprep.subr.mxu0 0.0
        %850 = vmatpush2.xpose.msra.mxu0 0.0
        %851 = vmatprep.subr.mxu0 0.0
        %852 = vmatpush2.xpose.msra.mxu0 0.0
        %853 = vmatprep.subr.mxu0 0.0
        %854 = vmatpush2.xpose.msra.mxu0 0.0
        %855 = vmatprep.subr.mxu0 0.0
        %856 = vmatpush2.xpose.msra.mxu0 0.0
        %857 = vmatprep.subr.mxu0 0.0
        %858 = vmatpush2.xpose.msra.mxu0 0.0
        %859 = vmatprep.subr.mxu0 0.0
        %860 = vmatpush2.xpose.msra.mxu0 0.0
        %861 = vmatprep.subr.mxu0 0.0
        %862 = vmatpush2.xpose.msra.mxu0 0.0
        %863 = vmatprep.subr.mxu0 0.0
        %864 = vmatpush2.xpose.msra.mxu0 0.0
        %865 = vmatprep.subr.mxu0 0.0
        %866 = vmatpush2.xpose.msra.mxu0 0.0
        %867 = vmatprep.subr.mxu0 0.0
        %868 = vmatpush2.xpose.msra.mxu0 0.0
        %869 = vmatprep.subr.mxu0 0.0
        %870 = vmatpush2.xpose.msra.mxu0 0.0
        %871 = vmatprep.subr.mxu0 0.0
        %872 = vmatpush2.xpose.msra.mxu0 0.0
        %873 = vmatprep.subr.mxu0 0.0
        %874 = vmatpush2.xpose.msra.mxu0 0.0
        %875 = vmatprep.subr.mxu0 0.0
        %876 = vmatpush2.xpose.msra.mxu0 0.0
        %877 = vmatprep.subr.mxu0 0.0
        %878 = vmatpush2.xpose.msra.mxu0 0.0
        %879 = vmatprep.mubr.f32.mxu0 0.0
        %v880 = vand.u32 %v325, 4294901760
        %v881 = vsub.f32 %v325, %v880
        %v882 = vand.u32 %v881, 4294901760
        %883 = vmatmul.mubr.f32.gmra.mxu0 %v882
        %v884 = vpop.f32.mrf.mxu0
        %v885 = vadd.f32 %v775, %v884
        %v886 = vpop.f32.mrf.mxu0
        %887 = vmatprep.mubr.f32.mxu0 0.0
        %v888 = vand.u32 %v328, 4294901760
        %v889 = vsub.f32 %v328, %v888
        %v890 = vand.u32 %v889, 4294901760
        %891 = vmatmul.mubr.f32.gmra.mxu0 %v890
        %v892 = vpop.f32.mrf.mxu0
        %v893 = vadd.f32 %v782, %v892
        %v894 = vpop.f32.mrf.mxu0
        %895 = vmatprep.mubr.f32.mxu0 0.0
        %v896 = vand.u32 %v331, 4294901760
        %v897 = vsub.f32 %v331, %v896
        %v898 = vand.u32 %v897, 4294901760
        %899 = vmatmul.mubr.f32.gmra.mxu0 %v898
        %v900 = vpop.f32.mrf.mxu0
        %v901 = vadd.f32 %v789, %v900
        %v902 = vpop.f32.mrf.mxu0
        %903 = vmatprep.mubr.f32.mxu0 0.0
        %v904 = vand.u32 %v334, 4294901760
        %v905 = vsub.f32 %v334, %v904
        %v906 = vand.u32 %v905, 4294901760
        %907 = vmatmul.mubr.f32.gmra.mxu0 %v906
        %v908 = vpop.f32.mrf.mxu0
        %v909 = vadd.f32 %v796, %v908
        %v910 = vpop.f32.mrf.mxu0
        %911 = vdwg.mxu0
        %912 = vmatprep.subr.mxu0 0.0
        %v913 = vand.u32 %v382, 4294901760
        %v914 = vsub.f32 %v382, %v913
        %v915 = vand.u32 %v914, 4294901760
        %916 = vmatpush1.xpose.msra.mxu0 %v915
        %917 = vmatprep.subr.mxu0 0.0
        %v918 = vand.u32 %v379, 4294901760
        %v919 = vsub.f32 %v379, %v918
        %v920 = vand.u32 %v919, 4294901760
        %921 = vmatpush1.xpose.msra.mxu0 %v920
        %922 = vmatprep.subr.mxu0 0.0
        %v923 = vand.u32 %v376, 4294901760
        %v924 = vsub.f32 %v376, %v923
        %v925 = vand.u32 %v924, 4294901760
        %926 = vmatpush1.xpose.msra.mxu0 %v925
        %927 = vmatprep.subr.mxu0 0.0
        %v928 = vand.u32 %v373, 4294901760
        %v929 = vsub.f32 %v373, %v928
        %v930 = vand.u32 %v929, 4294901760
        %931 = vmatpush1.xpose.msra.mxu0 %v930
        %932 = vmatprep.subr.mxu0 0.0
        %v933 = vand.u32 %v370, 4294901760
        %v934 = vsub.f32 %v370, %v933
        %v935 = vand.u32 %v934, 4294901760
        %936 = vmatpush1.xpose.msra.mxu0 %v935
        %937 = vmatprep.subr.mxu0 0.0
        %v938 = vand.u32 %v367, 4294901760
        %v939 = vsub.f32 %v367, %v938
        %v940 = vand.u32 %v939, 4294901760
        %941 = vmatpush1.xpose.msra.mxu0 %v940
        %942 = vmatprep.subr.mxu0 0.0
        %v943 = vand.u32 %v364, 4294901760
        %v944 = vsub.f32 %v364, %v943
        %v945 = vand.u32 %v944, 4294901760
        %946 = vmatpush1.xpose.msra.mxu0 %v945
        %947 = vmatprep.subr.mxu0 0.0
        %v948 = vand.u32 %v361, 4294901760
        %v949 = vsub.f32 %v361, %v948
        %v950 = vand.u32 %v949, 4294901760
        %951 = vmatpush1.xpose.msra.mxu0 %v950
        %952 = vmatprep.subr.mxu0 0.0
        %v953 = vand.u32 %v358, 4294901760
        %v954 = vsub.f32 %v358, %v953
        %v955 = vand.u32 %v954, 4294901760
        %956 = vmatpush1.xpose.msra.mxu0 %v955
        %957 = vmatprep.subr.mxu0 0.0
        %v958 = vand.u32 %v355, 4294901760
        %v959 = vsub.f32 %v355, %v958
        %v960 = vand.u32 %v959, 4294901760
        %961 = vmatpush1.xpose.msra.mxu0 %v960
        %962 = vmatprep.subr.mxu0 0.0
        %v963 = vand.u32 %v352, 4294901760
        %v964 = vsub.f32 %v352, %v963
        %v965 = vand.u32 %v964, 4294901760
        %966 = vmatpush1.xpose.msra.mxu0 %v965
        %967 = vmatprep.subr.mxu0 0.0
        %v968 = vand.u32 %v349, 4294901760
        %v969 = vsub.f32 %v349, %v968
        %v970 = vand.u32 %v969, 4294901760
        %971 = vmatpush1.xpose.msra.mxu0 %v970
        %972 = vmatprep.subr.mxu0 0.0
        %v973 = vand.u32 %v346, 4294901760
        %v974 = vsub.f32 %v346, %v973
        %v975 = vand.u32 %v974, 4294901760
        %976 = vmatpush1.xpose.msra.mxu0 %v975
        %977 = vmatprep.subr.mxu0 0.0
        %v978 = vand.u32 %v343, 4294901760
        %v979 = vsub.f32 %v343, %v978
        %v980 = vand.u32 %v979, 4294901760
        %981 = vmatpush1.xpose.msra.mxu0 %v980
        %982 = vmatprep.subr.mxu0 0.0
        %v983 = vand.u32 %v340, 4294901760
        %v984 = vsub.f32 %v340, %v983
        %v985 = vand.u32 %v984, 4294901760
        %986 = vmatpush1.xpose.msra.mxu0 %v985
        %987 = vmatprep.subr.mxu0 0.0
        %v988 = vand.u32 %v337, 4294901760
        %v989 = vsub.f32 %v337, %v988
        %v990 = vand.u32 %v989, 4294901760
        %991 = vmatpush1.xpose.msra.mxu0 %v990
        %992 = vmatprep.subr.mxu0 0.0
        %993 = vmatpush2.xpose.msra.mxu0 0.0
        %994 = vmatprep.subr.mxu0 0.0
        %995 = vmatpush2.xpose.msra.mxu0 0.0
        %996 = vmatprep.subr.mxu0 0.0
        %997 = vmatpush2.xpose.msra.mxu0 0.0
        %998 = vmatprep.subr.mxu0 0.0
        %999 = vmatpush2.xpose.msra.mxu0 0.0
        %1000 = vmatprep.subr.mxu0 0.0
        %1001 = vmatpush2.xpose.msra.mxu0 0.0
        %1002 = vmatprep.subr.mxu0 0.0
        %1003 = vmatpush2.xpose.msra.mxu0 0.0
        %1004 = vmatprep.subr.mxu0 0.0
        %1005 = vmatpush2.xpose.msra.mxu0 0.0
        %1006 = vmatprep.subr.mxu0 0.0
        %1007 = vmatpush2.xpose.msra.mxu0 0.0
        %1008 = vmatprep.subr.mxu0 0.0
        %1009 = vmatpush2.xpose.msra.mxu0 0.0
        %1010 = vmatprep.subr.mxu0 0.0
        %1011 = vmatpush2.xpose.msra.mxu0 0.0
        %1012 = vmatprep.subr.mxu0 0.0
        %1013 = vmatpush2.xpose.msra.mxu0 0.0
        %1014 = vmatprep.subr.mxu0 0.0
        %1015 = vmatpush2.xpose.msra.mxu0 0.0
        %1016 = vmatprep.subr.mxu0 0.0
        %1017 = vmatpush2.xpose.msra.mxu0 0.0
        %1018 = vmatprep.subr.mxu0 0.0
        %1019 = vmatpush2.xpose.msra.mxu0 0.0
        %1020 = vmatprep.subr.mxu0 0.0
        %1021 = vmatpush2.xpose.msra.mxu0 0.0
        %1022 = vmatprep.subr.mxu0 0.0
        %1023 = vmatpush2.xpose.msra.mxu0 0.0
        %1024 = vmatprep.mubr.f32.mxu0 0.0
        %v1025 = vand.u32 %v325, 4294901760
        %1026 = vmatmul.mubr.f32.gmra.mxu0 %v1025
        %v1027 = vpop.f32.mrf.mxu0
        %v1028 = vadd.f32 %v885, %v1027
        %v1029 = vpop.f32.mrf.mxu0
        %1030 = vmatprep.mubr.f32.mxu0 0.0
        %v1031 = vand.u32 %v328, 4294901760
        %1032 = vmatmul.mubr.f32.gmra.mxu0 %v1031
        %v1033 = vpop.f32.mrf.mxu0
        %v1034 = vadd.f32 %v893, %v1033
        %v1035 = vpop.f32.mrf.mxu0
        %1036 = vmatprep.mubr.f32.mxu0 0.0
        %v1037 = vand.u32 %v331, 4294901760
        %1038 = vmatmul.mubr.f32.gmra.mxu0 %v1037
        %v1039 = vpop.f32.mrf.mxu0
        %v1040 = vadd.f32 %v901, %v1039
        %v1041 = vpop.f32.mrf.mxu0
        %1042 = vmatprep.mubr.f32.mxu0 0.0
        %v1043 = vand.u32 %v334, 4294901760
        %1044 = vmatmul.mubr.f32.gmra.mxu0 %v1043
        %v1045 = vpop.f32.mrf.mxu0
        %v1046 = vadd.f32 %v909, %v1045
        %v1047 = vpop.f32.mrf.mxu0
        %1048 = vdwg.mxu0
        %1049 = vmatprep.subr.mxu0 0.0
        %v1050 = vand.u32 %v382, 4294901760
        %1051 = vmatpush1.xpose.msra.mxu0 %v1050
        %1052 = vmatprep.subr.mxu0 0.0
        %v1053 = vand.u32 %v379, 4294901760
        %1054 = vmatpush1.xpose.msra.mxu0 %v1053
        %1055 = vmatprep.subr.mxu0 0.0
        %v1056 = vand.u32 %v376, 4294901760
        %1057 = vmatpush1.xpose.msra.mxu0 %v1056
        %1058 = vmatprep.subr.mxu0 0.0
        %v1059 = vand.u32 %v373, 4294901760
        %1060 = vmatpush1.xpose.msra.mxu0 %v1059
        %1061 = vmatprep.subr.mxu0 0.0
        %v1062 = vand.u32 %v370, 4294901760
        %1063 = vmatpush1.xpose.msra.mxu0 %v1062
        %1064 = vmatprep.subr.mxu0 0.0
        %v1065 = vand.u32 %v367, 4294901760
        %1066 = vmatpush1.xpose.msra.mxu0 %v1065
        %1067 = vmatprep.subr.mxu0 0.0
        %v1068 = vand.u32 %v364, 4294901760
        %1069 = vmatpush1.xpose.msra.mxu0 %v1068
        %1070 = vmatprep.subr.mxu0 0.0
        %v1071 = vand.u32 %v361, 4294901760
        %1072 = vmatpush1.xpose.msra.mxu0 %v1071
        %1073 = vmatprep.subr.mxu0 0.0
        %v1074 = vand.u32 %v358, 4294901760
        %1075 = vmatpush1.xpose.msra.mxu0 %v1074
        %1076 = vmatprep.subr.mxu0 0.0
        %v1077 = vand.u32 %v355, 4294901760
        %1078 = vmatpush1.xpose.msra.mxu0 %v1077
        %1079 = vmatprep.subr.mxu0 0.0
        %v1080 = vand.u32 %v352, 4294901760
        %1081 = vmatpush1.xpose.msra.mxu0 %v1080
        %1082 = vmatprep.subr.mxu0 0.0
        %v1083 = vand.u32 %v349, 4294901760
        %1084 = vmatpush1.xpose.msra.mxu0 %v1083
        %1085 = vmatprep.subr.mxu0 0.0
        %v1086 = vand.u32 %v346, 4294901760
        %1087 = vmatpush1.xpose.msra.mxu0 %v1086
        %1088 = vmatprep.subr.mxu0 0.0
        %v1089 = vand.u32 %v343, 4294901760
        %1090 = vmatpush1.xpose.msra.mxu0 %v1089
        %1091 = vmatprep.subr.mxu0 0.0
        %v1092 = vand.u32 %v340, 4294901760
        %1093 = vmatpush1.xpose.msra.mxu0 %v1092
        %1094 = vmatprep.subr.mxu0 0.0
        %v1095 = vand.u32 %v337, 4294901760
        %1096 = vmatpush1.xpose.msra.mxu0 %v1095
        %1097 = vmatprep.subr.mxu0 0.0
        %1098 = vmatpush2.xpose.msra.mxu0 0.0
        %1099 = vmatprep.subr.mxu0 0.0
        %1100 = vmatpush2.xpose.msra.mxu0 0.0
        %1101 = vmatprep.subr.mxu0 0.0
        %1102 = vmatpush2.xpose.msra.mxu0 0.0
        %1103 = vmatprep.subr.mxu0 0.0
        %1104 = vmatpush2.xpose.msra.mxu0 0.0
        %1105 = vmatprep.subr.mxu0 0.0
        %1106 = vmatpush2.xpose.msra.mxu0 0.0
        %1107 = vmatprep.subr.mxu0 0.0
        %1108 = vmatpush2.xpose.msra.mxu0 0.0
        %1109 = vmatprep.subr.mxu0 0.0
        %1110 = vmatpush2.xpose.msra.mxu0 0.0
        %1111 = vmatprep.subr.mxu0 0.0
        %1112 = vmatpush2.xpose.msra.mxu0 0.0
        %1113 = vmatprep.subr.mxu0 0.0
        %1114 = vmatpush2.xpose.msra.mxu0 0.0
        %1115 = vmatprep.subr.mxu0 0.0
        %1116 = vmatpush2.xpose.msra.mxu0 0.0
        %1117 = vmatprep.subr.mxu0 0.0
        %1118 = vmatpush2.xpose.msra.mxu0 0.0
        %1119 = vmatprep.subr.mxu0 0.0
        %1120 = vmatpush2.xpose.msra.mxu0 0.0
        %1121 = vmatprep.subr.mxu0 0.0
        %1122 = vmatpush2.xpose.msra.mxu0 0.0
        %1123 = vmatprep.subr.mxu0 0.0
        %1124 = vmatpush2.xpose.msra.mxu0 0.0
        %1125 = vmatprep.subr.mxu0 0.0
        %1126 = vmatpush2.xpose.msra.mxu0 0.0
        %1127 = vmatprep.subr.mxu0 0.0
        %1128 = vmatpush2.xpose.msra.mxu0 0.0
        %1129 = vmatprep.mubr.f32.mxu0 0.0
        %v1130 = vand.u32 %v325, 4294901760
        %1131 = vmatmul.mubr.f32.gmra.mxu0 %v1130
        %v1132 = vpop.f32.mrf.mxu0
        %v1133 = vadd.f32 %v1028, %v1132
        %v1134 = vpop.f32.mrf.mxu0
        %1135 = vmatprep.mubr.f32.mxu0 0.0
        %v1136 = vand.u32 %v328, 4294901760
        %1137 = vmatmul.mubr.f32.gmra.mxu0 %v1136
        %v1138 = vpop.f32.mrf.mxu0
        %v1139 = vadd.f32 %v1034, %v1138
        %v1140 = vpop.f32.mrf.mxu0
        %1141 = vmatprep.mubr.f32.mxu0 0.0
        %v1142 = vand.u32 %v331, 4294901760
        %1143 = vmatmul.mubr.f32.gmra.mxu0 %v1142
        %v1144 = vpop.f32.mrf.mxu0
        %v1145 = vadd.f32 %v1040, %v1144
        %v1146 = vpop.f32.mrf.mxu0
        %1147 = vmatprep.mubr.f32.mxu0 0.0
        %v1148 = vand.u32 %v334, 4294901760
        %1149 = vmatmul.mubr.f32.gmra.mxu0 %v1148
        %v1150 = vpop.f32.mrf.mxu0
        %v1151 = vadd.f32 %v1046, %v1150
        %v1152 = vpop.f32.mrf.mxu0
        %1153 = vdwg.mxu0
        %v1154 = vtanh.pop %v1133
        %v1155 = vtanh.pop %v1139
        %v1156 = vtanh.pop %v1145
        %v1157 = vtanh.pop %v1151
        %v1158 = vld [vmem:[%s2] sm:$0xff]
        %v1159 = vld [vmem:[%s2 + $0x8] sm:$0xff]
        %v1160 = vld [vmem:[%s2 + $0x10] sm:$0xff]
        %v1161 = vld [vmem:[%s2 + $0x18] sm:$0xff]
        %v1162 = vld [vmem:[%s3] sm:$0xff]
        %v1163 = vld [vmem:[%s3 + $0x8] sm:$0xff]
        %v1164 = vld [vmem:[%s3 + $0x10] sm:$0xff]
        %v1165 = vld [vmem:[%s3 + $0x18] sm:$0xff]
        %1167 = vset.pattern.permute.xlu0 0
        %1168 = vperm.xlu0 %1167, %v1162
        %v1169 = vpop.permute.xlu0 %1168
        %1172 = vset.pattern.permute.xlu0 0
        %1173 = vperm.xlu0 %1172, %v1163
        %v1174 = vpop.permute.xlu0 %1173
        %1177 = vset.pattern.permute.xlu0 0
        %1178 = vperm.xlu0 %1177, %v1164
        %v1179 = vpop.permute.xlu0 %1178
        %1182 = vset.pattern.permute.xlu0 0
        %1183 = vperm.xlu0 %1182, %v1165
        %v1184 = vpop.permute.xlu0 %1183
        %vm1186 = vcmask 261120
        %v1188 = vsel %vm1186, %v1158, 0
        %v1191 = vsel %vm1186, %v1159, 0
        %v1194 = vsel %vm1186, %v1160, 0
        %v1197 = vsel %vm1186, %v1161, 0
        %1199 = vmatprep.subr.mxu0 0.0
        %1200 = vmatpush1.msra.mxu0 0.0
        %1201 = vmatprep.subr.mxu0 0.0
        %1202 = vmatpush1.msra.mxu0 0.0
        %1203 = vmatprep.subr.mxu0 0.0
        %1204 = vmatpush1.msra.mxu0 0.0
        %1205 = vmatprep.subr.mxu0 0.0
        %1206 = vmatpush1.msra.mxu0 0.0
        %1207 = vmatprep.subr.mxu0 0.0
        %1208 = vmatpush1.msra.mxu0 0.0
        %1209 = vmatprep.subr.mxu0 0.0
        %1210 = vmatpush1.msra.mxu0 0.0
        %1211 = vmatprep.subr.mxu0 0.0
        %1212 = vmatpush1.msra.mxu0 0.0
        %1213 = vmatprep.subr.mxu0 0.0
        %1214 = vmatpush1.msra.mxu0 0.0
        %1215 = vmatprep.subr.mxu0 0.0
        %1216 = vmatpush1.msra.mxu0 0.0
        %1217 = vmatprep.subr.mxu0 0.0
        %1218 = vmatpush1.msra.mxu0 0.0
        %1219 = vmatprep.subr.mxu0 0.0
        %1220 = vmatpush1.msra.mxu0 0.0
        %1221 = vmatprep.subr.mxu0 0.0
        %1222 = vmatpush1.msra.mxu0 0.0
        %1223 = vmatprep.subr.mxu0 0.0
        %v1224 = vand.u32 %v1157, 4294901760
        %1225 = vmatpush1.msra.mxu0 %v1224
        %1226 = vmatprep.subr.mxu0 0.0
        %v1227 = vand.u32 %v1156, 4294901760
        %1228 = vmatpush1.msra.mxu0 %v1227
        %1229 = vmatprep.subr.mxu0 0.0
        %v1230 = vand.u32 %v1155, 4294901760
        %1231 = vmatpush1.msra.mxu0 %v1230
        %1232 = vmatprep.subr.mxu0 0.0
        %v1233 = vand.u32 %v1154, 4294901760
        %1234 = vmatpush1.msra.mxu0 %v1233
        %1235 = vmatprep.subr.mxu0 0.0
        %1236 = vmatpush2.msra.mxu0 0.0
        %1237 = vmatprep.subr.mxu0 0.0
        %1238 = vmatpush2.msra.mxu0 0.0
        %1239 = vmatprep.subr.mxu0 0.0
        %1240 = vmatpush2.msra.mxu0 0.0
        %1241 = vmatprep.subr.mxu0 0.0
        %1242 = vmatpush2.msra.mxu0 0.0
        %1243 = vmatprep.subr.mxu0 0.0
        %1244 = vmatpush2.msra.mxu0 0.0
        %1245 = vmatprep.subr.mxu0 0.0
        %1246 = vmatpush2.msra.mxu0 0.0
        %1247 = vmatprep.subr.mxu0 0.0
        %1248 = vmatpush2.msra.mxu0 0.0
        %1249 = vmatprep.subr.mxu0 0.0
        %1250 = vmatpush2.msra.mxu0 0.0
        %1251 = vmatprep.subr.mxu0 0.0
        %1252 = vmatpush2.msra.mxu0 0.0
        %1253 = vmatprep.subr.mxu0 0.0
        %1254 = vmatpush2.msra.mxu0 0.0
        %1255 = vmatprep.subr.mxu0 0.0
        %1256 = vmatpush2.msra.mxu0 0.0
        %1257 = vmatprep.subr.mxu0 0.0
        %1258 = vmatpush2.msra.mxu0 0.0
        %1259 = vmatprep.subr.mxu0 0.0
        %1260 = vmatpush2.msra.mxu0 0.0
        %1261 = vmatprep.subr.mxu0 0.0
        %1262 = vmatpush2.msra.mxu0 0.0
        %1263 = vmatprep.subr.mxu0 0.0
        %1264 = vmatpush2.msra.mxu0 0.0
        %1265 = vmatprep.subr.mxu0 0.0
        %1266 = vmatpush2.msra.mxu0 0.0
        %1267 = vmatprep.mubr.f32.mxu0 0.0
        %v1268 = vand.u32 %v1188, 4294901760
        %v1269 = vsub.f32 %v1188, %v1268
        %v1270 = vand.u32 %v1269, 4294901760
        %v1271 = vsub.f32 %v1269, %v1270
        %v1272 = vand.u32 %v1271, 4294901760
        %1273 = vmatmul.mubr.f32.gmra.mxu0 %v1272
        %v1274 = vpop.f32.mrf.mxu0
        %v1275 = vadd.f32 %v1169, %v1274
        %v1276 = vpop.f32.mrf.mxu0
        %1277 = vmatprep.mubr.f32.mxu0 0.0
        %v1278 = vand.u32 %v1191, 4294901760
        %v1279 = vsub.f32 %v1191, %v1278
        %v1280 = vand.u32 %v1279, 4294901760
        %v1281 = vsub.f32 %v1279, %v1280
        %v1282 = vand.u32 %v1281, 4294901760
        %1283 = vmatmul.mubr.f32.gmra.mxu0 %v1282
        %v1284 = vpop.f32.mrf.mxu0
        %v1285 = vadd.f32 %v1174, %v1284
        %v1286 = vpop.f32.mrf.mxu0
        %1287 = vmatprep.mubr.f32.mxu0 0.0
        %v1288 = vand.u32 %v1194, 4294901760
        %v1289 = vsub.f32 %v1194, %v1288
        %v1290 = vand.u32 %v1289, 4294901760
        %v1291 = vsub.f32 %v1289, %v1290
        %v1292 = vand.u32 %v1291, 4294901760
        %1293 = vmatmul.mubr.f32.gmra.mxu0 %v1292
        %v1294 = vpop.f32.mrf.mxu0
        %v1295 = vadd.f32 %v1179, %v1294
        %v1296 = vpop.f32.mrf.mxu0
        %1297 = vmatprep.mubr.f32.mxu0 0.0
        %v1298 = vand.u32 %v1197, 4294901760
        %v1299 = vsub.f32 %v1197, %v1298
        %v1300 = vand.u32 %v1299, 4294901760
        %v1301 = vsub.f32 %v1299, %v1300
        %v1302 = vand.u32 %v1301, 4294901760
        %1303 = vmatmul.mubr.f32.gmra.mxu0 %v1302
        %v1304 = vpop.f32.mrf.mxu0
        %v1305 = vadd.f32 %v1184, %v1304
        %v1306 = vpop.f32.mrf.mxu0
        %1307 = vdwg.mxu0
        %1308 = vmatprep.subr.mxu0 0.0
        %1309 = vmatpush1.msra.mxu0 0.0
        %1310 = vmatprep.subr.mxu0 0.0
        %1311 = vmatpush1.msra.mxu0 0.0
        %1312 = vmatprep.subr.mxu0 0.0
        %1313 = vmatpush1.msra.mxu0 0.0
        %1314 = vmatprep.subr.mxu0 0.0
        %1315 = vmatpush1.msra.mxu0 0.0
        %1316 = vmatprep.subr.mxu0 0.0
        %1317 = vmatpush1.msra.mxu0 0.0
        %1318 = vmatprep.subr.mxu0 0.0
        %1319 = vmatpush1.msra.mxu0 0.0
        %1320 = vmatprep.subr.mxu0 0.0
        %1321 = vmatpush1.msra.mxu0 0.0
        %1322 = vmatprep.subr.mxu0 0.0
        %1323 = vmatpush1.msra.mxu0 0.0
        %1324 = vmatprep.subr.mxu0 0.0
        %1325 = vmatpush1.msra.mxu0 0.0
        %1326 = vmatprep.subr.mxu0 0.0
        %1327 = vmatpush1.msra.mxu0 0.0
        %1328 = vmatprep.subr.mxu0 0.0
        %1329 = vmatpush1.msra.mxu0 0.0
        %1330 = vmatprep.subr.mxu0 0.0
        %1331 = vmatpush1.msra.mxu0 0.0
        %1332 = vmatprep.subr.mxu0 0.0
        %v1333 = vand.u32 %v1157, 4294901760
        %v1334 = vsub.f32 %v1157, %v1333
        %v1335 = vand.u32 %v1334, 4294901760
        %v1336 = vsub.f32 %v1334, %v1335
        %v1337 = vand.u32 %v1336, 4294901760
        %1338 = vmatpush1.msra.mxu0 %v1337
        %1339 = vmatprep.subr.mxu0 0.0
        %v1340 = vand.u32 %v1156, 4294901760
        %v1341 = vsub.f32 %v1156, %v1340
        %v1342 = vand.u32 %v1341, 4294901760
        %v1343 = vsub.f32 %v1341, %v1342
        %v1344 = vand.u32 %v1343, 4294901760
        %1345 = vmatpush1.msra.mxu0 %v1344
        %1346 = vmatprep.subr.mxu0 0.0
        %v1347 = vand.u32 %v1155, 4294901760
        %v1348 = vsub.f32 %v1155, %v1347
        %v1349 = vand.u32 %v1348, 4294901760
        %v1350 = vsub.f32 %v1348, %v1349
        %v1351 = vand.u32 %v1350, 4294901760
        %1352 = vmatpush1.msra.mxu0 %v1351
        %1353 = vmatprep.subr.mxu0 0.0
        %v1354 = vand.u32 %v1154, 4294901760
        %v1355 = vsub.f32 %v1154, %v1354
        %v1356 = vand.u32 %v1355, 4294901760
        %v1357 = vsub.f32 %v1355, %v1356
        %v1358 = vand.u32 %v1357, 4294901760
        %1359 = vmatpush1.msra.mxu0 %v1358
        %1360 = vmatprep.subr.mxu0 0.0
        %1361 = vmatpush2.msra.mxu0 0.0
        %1362 = vmatprep.subr.mxu0 0.0
        %1363 = vmatpush2.msra.mxu0 0.0
        %1364 = vmatprep.subr.mxu0 0.0
        %1365 = vmatpush2.msra.mxu0 0.0
        %1366 = vmatprep.subr.mxu0 0.0
        %1367 = vmatpush2.msra.mxu0 0.0
        %1368 = vmatprep.subr.mxu0 0.0
        %1369 = vmatpush2.msra.mxu0 0.0
        %1370 = vmatprep.subr.mxu0 0.0
        %1371 = vmatpush2.msra.mxu0 0.0
        %1372 = vmatprep.subr.mxu0 0.0
        %1373 = vmatpush2.msra.mxu0 0.0
        %1374 = vmatprep.subr.mxu0 0.0
        %1375 = vmatpush2.msra.mxu0 0.0
        %1376 = vmatprep.subr.mxu0 0.0
        %1377 = vmatpush2.msra.mxu0 0.0
        %1378 = vmatprep.subr.mxu0 0.0
        %1379 = vmatpush2.msra.mxu0 0.0
        %1380 = vmatprep.subr.mxu0 0.0
        %1381 = vmatpush2.msra.mxu0 0.0
        %1382 = vmatprep.subr.mxu0 0.0
        %1383 = vmatpush2.msra.mxu0 0.0
        %1384 = vmatprep.subr.mxu0 0.0
        %1385 = vmatpush2.msra.mxu0 0.0
        %1386 = vmatprep.subr.mxu0 0.0
        %1387 = vmatpush2.msra.mxu0 0.0
        %1388 = vmatprep.subr.mxu0 0.0
        %1389 = vmatpush2.msra.mxu0 0.0
        %1390 = vmatprep.subr.mxu0 0.0
        %1391 = vmatpush2.msra.mxu0 0.0
        %1392 = vmatprep.mubr.f32.mxu0 0.0
        %v1393 = vand.u32 %v1188, 4294901760
        %1394 = vmatmul.mubr.f32.gmra.mxu0 %v1393
        %v1395 = vpop.f32.mrf.mxu0
        %v1396 = vadd.f32 %v1275, %v1395
        %v1397 = vpop.f32.mrf.mxu0
        %1398 = vmatprep.mubr.f32.mxu0 0.0
        %v1399 = vand.u32 %v1191, 4294901760
        %1400 = vmatmul.mubr.f32.gmra.mxu0 %v1399
        %v1401 = vpop.f32.mrf.mxu0
        %v1402 = vadd.f32 %v1285, %v1401
        %v1403 = vpop.f32.mrf.mxu0
        %1404 = vmatprep.mubr.f32.mxu0 0.0
        %v1405 = vand.u32 %v1194, 4294901760
        %1406 = vmatmul.mubr.f32.gmra.mxu0 %v1405
        %v1407 = vpop.f32.mrf.mxu0
        %v1408 = vadd.f32 %v1295, %v1407
        %v1409 = vpop.f32.mrf.mxu0
        %1410 = vmatprep.mubr.f32.mxu0 0.0
        %v1411 = vand.u32 %v1197, 4294901760
        %1412 = vmatmul.mubr.f32.gmra.mxu0 %v1411
        %v1413 = vpop.f32.mrf.mxu0
        %v1414 = vadd.f32 %v1305, %v1413
        %v1415 = vpop.f32.mrf.mxu0
        %1416 = vdwg.mxu0
        %1417 = vmatprep.subr.mxu0 0.0
        %1418 = vmatpush1.msra.mxu0 0.0
        %1419 = vmatprep.subr.mxu0 0.0
        %1420 = vmatpush1.msra.mxu0 0.0
        %1421 = vmatprep.subr.mxu0 0.0
        %1422 = vmatpush1.msra.mxu0 0.0
        %1423 = vmatprep.subr.mxu0 0.0
        %1424 = vmatpush1.msra.mxu0 0.0
        %1425 = vmatprep.subr.mxu0 0.0
        %1426 = vmatpush1.msra.mxu0 0.0
        %1427 = vmatprep.subr.mxu0 0.0
        %1428 = vmatpush1.msra.mxu0 0.0
        %1429 = vmatprep.subr.mxu0 0.0
        %1430 = vmatpush1.msra.mxu0 0.0
        %1431 = vmatprep.subr.mxu0 0.0
        %1432 = vmatpush1.msra.mxu0 0.0
        %1433 = vmatprep.subr.mxu0 0.0
        %1434 = vmatpush1.msra.mxu0 0.0
        %1435 = vmatprep.subr.mxu0 0.0
        %1436 = vmatpush1.msra.mxu0 0.0
        %1437 = vmatprep.subr.mxu0 0.0
        %1438 = vmatpush1.msra.mxu0 0.0
        %1439 = vmatprep.subr.mxu0 0.0
        %1440 = vmatpush1.msra.mxu0 0.0
        %1441 = vmatprep.subr.mxu0 0.0
        %v1442 = vand.u32 %v1157, 4294901760
        %v1443 = vsub.f32 %v1157, %v1442
        %1444 = vmatpush1.msra.mxu0 %v1443
        %1445 = vmatprep.subr.mxu0 0.0
        %v1446 = vand.u32 %v1156, 4294901760
        %v1447 = vsub.f32 %v1156, %v1446
        %1448 = vmatpush1.msra.mxu0 %v1447
        %1449 = vmatprep.subr.mxu0 0.0
        %v1450 = vand.u32 %v1155, 4294901760
        %v1451 = vsub.f32 %v1155, %v1450
        %1452 = vmatpush1.msra.mxu0 %v1451
        %1453 = vmatprep.subr.mxu0 0.0
        %v1454 = vand.u32 %v1154, 4294901760
        %v1455 = vsub.f32 %v1154, %v1454
        %1456 = vmatpush1.msra.mxu0 %v1455
        %1457 = vmatprep.subr.mxu0 0.0
        %1458 = vmatpush2.msra.mxu0 0.0
        %1459 = vmatprep.subr.mxu0 0.0
        %1460 = vmatpush2.msra.mxu0 0.0
        %1461 = vmatprep.subr.mxu0 0.0
        %1462 = vmatpush2.msra.mxu0 0.0
        %1463 = vmatprep.subr.mxu0 0.0
        %1464 = vmatpush2.msra.mxu0 0.0
        %1465 = vmatprep.subr.mxu0 0.0
        %1466 = vmatpush2.msra.mxu0 0.0
        %1467 = vmatprep.subr.mxu0 0.0
        %1468 = vmatpush2.msra.mxu0 0.0
        %1469 = vmatprep.subr.mxu0 0.0
        %1470 = vmatpush2.msra.mxu0 0.0
        %1471 = vmatprep.subr.mxu0 0.0
        %1472 = vmatpush2.msra.mxu0 0.0
        %1473 = vmatprep.subr.mxu0 0.0
        %1474 = vmatpush2.msra.mxu0 0.0
        %1475 = vmatprep.subr.mxu0 0.0
        %1476 = vmatpush2.msra.mxu0 0.0
        %1477 = vmatprep.subr.mxu0 0.0
        %1478 = vmatpush2.msra.mxu0 0.0
        %1479 = vmatprep.subr.mxu0 0.0
        %1480 = vmatpush2.msra.mxu0 0.0
        %1481 = vmatprep.subr.mxu0 0.0
        %1482 = vmatpush2.msra.mxu0 0.0
        %1483 = vmatprep.subr.mxu0 0.0
        %1484 = vmatpush2.msra.mxu0 0.0
        %1485 = vmatprep.subr.mxu0 0.0
        %1486 = vmatpush2.msra.mxu0 0.0
        %1487 = vmatprep.subr.mxu0 0.0
        %1488 = vmatpush2.msra.mxu0 0.0
        %1489 = vmatprep.mubr.f32.mxu0 0.0
        %v1490 = vand.u32 %v1188, 4294901760
        %v1491 = vsub.f32 %v1188, %v1490
        %1492 = vmatmul.mubr.f32.gmra.mxu0 %v1491
        %v1493 = vpop.f32.mrf.mxu0
        %v1494 = vadd.f32 %v1396, %v1493
        %v1495 = vpop.f32.mrf.mxu0
        %1496 = vmatprep.mubr.f32.mxu0 0.0
        %v1497 = vand.u32 %v1191, 4294901760
        %v1498 = vsub.f32 %v1191, %v1497
        %1499 = vmatmul.mubr.f32.gmra.mxu0 %v1498
        %v1500 = vpop.f32.mrf.mxu0
        %v1501 = vadd.f32 %v1402, %v1500
        %v1502 = vpop.f32.mrf.mxu0
        %1503 = vmatprep.mubr.f32.mxu0 0.0
        %v1504 = vand.u32 %v1194, 4294901760
        %v1505 = vsub.f32 %v1194, %v1504
        %1506 = vmatmul.mubr.f32.gmra.mxu0 %v1505
        %v1507 = vpop.f32.mrf.mxu0
        %v1508 = vadd.f32 %v1408, %v1507
        %v1509 = vpop.f32.mrf.mxu0
        %1510 = vmatprep.mubr.f32.mxu0 0.0
        %v1511 = vand.u32 %v1197, 4294901760
        %v1512 = vsub.f32 %v1197, %v1511
        %1513 = vmatmul.mubr.f32.gmra.mxu0 %v1512
        %v1514 = vpop.f32.mrf.mxu0
        %v1515 = vadd.f32 %v1414, %v1514
        %v1516 = vpop.f32.mrf.mxu0
        %1517 = vdwg.mxu0
        %1518 = vmatprep.subr.mxu0 0.0
        %1519 = vmatpush1.msra.mxu0 0.0
        %1520 = vmatprep.subr.mxu0 0.0
        %1521 = vmatpush1.msra.mxu0 0.0
        %1522 = vmatprep.subr.mxu0 0.0
        %1523 = vmatpush1.msra.mxu0 0.0
        %1524 = vmatprep.subr.mxu0 0.0
        %1525 = vmatpush1.msra.mxu0 0.0
        %1526 = vmatprep.subr.mxu0 0.0
        %1527 = vmatpush1.msra.mxu0 0.0
        %1528 = vmatprep.subr.mxu0 0.0
        %1529 = vmatpush1.msra.mxu0 0.0
        %1530 = vmatprep.subr.mxu0 0.0
        %1531 = vmatpush1.msra.mxu0 0.0
        %1532 = vmatprep.subr.mxu0 0.0
        %1533 = vmatpush1.msra.mxu0 0.0
        %1534 = vmatprep.subr.mxu0 0.0
        %1535 = vmatpush1.msra.mxu0 0.0
        %1536 = vmatprep.subr.mxu0 0.0
        %1537 = vmatpush1.msra.mxu0 0.0
        %1538 = vmatprep.subr.mxu0 0.0
        %1539 = vmatpush1.msra.mxu0 0.0
        %1540 = vmatprep.subr.mxu0 0.0
        %1541 = vmatpush1.msra.mxu0 0.0
        %1542 = vmatprep.subr.mxu0 0.0
        %v1543 = vand.u32 %v1157, 4294901760
        %1544 = vmatpush1.msra.mxu0 %v1543
        %1545 = vmatprep.subr.mxu0 0.0
        %v1546 = vand.u32 %v1156, 4294901760
        %1547 = vmatpush1.msra.mxu0 %v1546
        %1548 = vmatprep.subr.mxu0 0.0
        %v1549 = vand.u32 %v1155, 4294901760
        %1550 = vmatpush1.msra.mxu0 %v1549
        %1551 = vmatprep.subr.mxu0 0.0
        %v1552 = vand.u32 %v1154, 4294901760
        %1553 = vmatpush1.msra.mxu0 %v1552
        %1554 = vmatprep.subr.mxu0 0.0
        %1555 = vmatpush2.msra.mxu0 0.0
        %1556 = vmatprep.subr.mxu0 0.0
        %1557 = vmatpush2.msra.mxu0 0.0
        %1558 = vmatprep.subr.mxu0 0.0
        %1559 = vmatpush2.msra.mxu0 0.0
        %1560 = vmatprep.subr.mxu0 0.0
        %1561 = vmatpush2.msra.mxu0 0.0
        %1562 = vmatprep.subr.mxu0 0.0
        %1563 = vmatpush2.msra.mxu0 0.0
        %1564 = vmatprep.subr.mxu0 0.0
        %1565 = vmatpush2.msra.mxu0 0.0
        %1566 = vmatprep.subr.mxu0 0.0
        %1567 = vmatpush2.msra.mxu0 0.0
        %1568 = vmatprep.subr.mxu0 0.0
        %1569 = vmatpush2.msra.mxu0 0.0
        %1570 = vmatprep.subr.mxu0 0.0
        %1571 = vmatpush2.msra.mxu0 0.0
        %1572 = vmatprep.subr.mxu0 0.0
        %1573 = vmatpush2.msra.mxu0 0.0
        %1574 = vmatprep.subr.mxu0 0.0
        %1575 = vmatpush2.msra.mxu0 0.0
        %1576 = vmatprep.subr.mxu0 0.0
        %1577 = vmatpush2.msra.mxu0 0.0
        %1578 = vmatprep.subr.mxu0 0.0
        %1579 = vmatpush2.msra.mxu0 0.0
        %1580 = vmatprep.subr.mxu0 0.0
        %1581 = vmatpush2.msra.mxu0 0.0
        %1582 = vmatprep.subr.mxu0 0.0
        %1583 = vmatpush2.msra.mxu0 0.0
        %1584 = vmatprep.subr.mxu0 0.0
        %1585 = vmatpush2.msra.mxu0 0.0
        %1586 = vmatprep.mubr.f32.mxu0 0.0
        %v1587 = vand.u32 %v1188, 4294901760
        %v1588 = vsub.f32 %v1188, %v1587
        %v1589 = vand.u32 %v1588, 4294901760
        %1590 = vmatmul.mubr.f32.gmra.mxu0 %v1589
        %v1591 = vpop.f32.mrf.mxu0
        %v1592 = vadd.f32 %v1494, %v1591
        %v1593 = vpop.f32.mrf.mxu0
        %1594 = vmatprep.mubr.f32.mxu0 0.0
        %v1595 = vand.u32 %v1191, 4294901760
        %v1596 = vsub.f32 %v1191, %v1595
        %v1597 = vand.u32 %v1596, 4294901760
        %1598 = vmatmul.mubr.f32.gmra.mxu0 %v1597
        %v1599 = vpop.f32.mrf.mxu0
        %v1600 = vadd.f32 %v1501, %v1599
        %v1601 = vpop.f32.mrf.mxu0
        %1602 = vmatprep.mubr.f32.mxu0 0.0
        %v1603 = vand.u32 %v1194, 4294901760
        %v1604 = vsub.f32 %v1194, %v1603
        %v1605 = vand.u32 %v1604, 4294901760
        %1606 = vmatmul.mubr.f32.gmra.mxu0 %v1605
        %v1607 = vpop.f32.mrf.mxu0
        %v1608 = vadd.f32 %v1508, %v1607
        %v1609 = vpop.f32.mrf.mxu0
        %1610 = vmatprep.mubr.f32.mxu0 0.0
        %v1611 = vand.u32 %v1197, 4294901760
        %v1612 = vsub.f32 %v1197, %v1611
        %v1613 = vand.u32 %v1612, 4294901760
        %1614 = vmatmul.mubr.f32.gmra.mxu0 %v1613
        %v1615 = vpop.f32.mrf.mxu0
        %v1616 = vadd.f32 %v1515, %v1615
        %v1617 = vpop.f32.mrf.mxu0
        %1618 = vdwg.mxu0
        %1619 = vmatprep.subr.mxu0 0.0
        %1620 = vmatpush1.msra.mxu0 0.0
        %1621 = vmatprep.subr.mxu0 0.0
        %1622 = vmatpush1.msra.mxu0 0.0
        %1623 = vmatprep.subr.mxu0 0.0
        %1624 = vmatpush1.msra.mxu0 0.0
        %1625 = vmatprep.subr.mxu0 0.0
        %1626 = vmatpush1.msra.mxu0 0.0
        %1627 = vmatprep.subr.mxu0 0.0
        %1628 = vmatpush1.msra.mxu0 0.0
        %1629 = vmatprep.subr.mxu0 0.0
        %1630 = vmatpush1.msra.mxu0 0.0
        %1631 = vmatprep.subr.mxu0 0.0
        %1632 = vmatpush1.msra.mxu0 0.0
        %1633 = vmatprep.subr.mxu0 0.0
        %1634 = vmatpush1.msra.mxu0 0.0
        %1635 = vmatprep.subr.mxu0 0.0
        %1636 = vmatpush1.msra.mxu0 0.0
        %1637 = vmatprep.subr.mxu0 0.0
        %1638 = vmatpush1.msra.mxu0 0.0
        %1639 = vmatprep.subr.mxu0 0.0
        %1640 = vmatpush1.msra.mxu0 0.0
        %1641 = vmatprep.subr.mxu0 0.0
        %1642 = vmatpush1.msra.mxu0 0.0
        %1643 = vmatprep.subr.mxu0 0.0
        %v1644 = vand.u32 %v1157, 4294901760
        %v1645 = vsub.f32 %v1157, %v1644
        %v1646 = vand.u32 %v1645, 4294901760
        %1647 = vmatpush1.msra.mxu0 %v1646
        %1648 = vmatprep.subr.mxu0 0.0
        %v1649 = vand.u32 %v1156, 4294901760
        %v1650 = vsub.f32 %v1156, %v1649
        %v1651 = vand.u32 %v1650, 4294901760
        %1652 = vmatpush1.msra.mxu0 %v1651
        %1653 = vmatprep.subr.mxu0 0.0
        %v1654 = vand.u32 %v1155, 4294901760
        %v1655 = vsub.f32 %v1155, %v1654
        %v1656 = vand.u32 %v1655, 4294901760
        %1657 = vmatpush1.msra.mxu0 %v1656
        %1658 = vmatprep.subr.mxu0 0.0
        %v1659 = vand.u32 %v1154, 4294901760
        %v1660 = vsub.f32 %v1154, %v1659
        %v1661 = vand.u32 %v1660, 4294901760
        %1662 = vmatpush1.msra.mxu0 %v1661
        %1663 = vmatprep.subr.mxu0 0.0
        %1664 = vmatpush2.msra.mxu0 0.0
        %1665 = vmatprep.subr.mxu0 0.0
        %1666 = vmatpush2.msra.mxu0 0.0
        %1667 = vmatprep.subr.mxu0 0.0
        %1668 = vmatpush2.msra.mxu0 0.0
        %1669 = vmatprep.subr.mxu0 0.0
        %1670 = vmatpush2.msra.mxu0 0.0
        %1671 = vmatprep.subr.mxu0 0.0
        %1672 = vmatpush2.msra.mxu0 0.0
        %1673 = vmatprep.subr.mxu0 0.0
        %1674 = vmatpush2.msra.mxu0 0.0
        %1675 = vmatprep.subr.mxu0 0.0
        %1676 = vmatpush2.msra.mxu0 0.0
        %1677 = vmatprep.subr.mxu0 0.0
        %1678 = vmatpush2.msra.mxu0 0.0
        %1679 = vmatprep.subr.mxu0 0.0
        %1680 = vmatpush2.msra.mxu0 0.0
        %1681 = vmatprep.subr.mxu0 0.0
        %1682 = vmatpush2.msra.mxu0 0.0
        %1683 = vmatprep.subr.mxu0 0.0
        %1684 = vmatpush2.msra.mxu0 0.0
        %1685 = vmatprep.subr.mxu0 0.0
        %1686 = vmatpush2.msra.mxu0 0.0
        %1687 = vmatprep.subr.mxu0 0.0
        %1688 = vmatpush2.msra.mxu0 0.0
        %1689 = vmatprep.subr.mxu0 0.0
        %1690 = vmatpush2.msra.mxu0 0.0
        %1691 = vmatprep.subr.mxu0 0.0
        %1692 = vmatpush2.msra.mxu0 0.0
        %1693 = vmatprep.subr.mxu0 0.0
        %1694 = vmatpush2.msra.mxu0 0.0
        %1695 = vmatprep.mubr.f32.mxu0 0.0
        %v1696 = vand.u32 %v1188, 4294901760
        %1697 = vmatmul.mubr.f32.gmra.mxu0 %v1696
        %v1698 = vpop.f32.mrf.mxu0
        %v1699 = vadd.f32 %v1592, %v1698
        %v1700 = vpop.f32.mrf.mxu0
        %1701 = vmatprep.mubr.f32.mxu0 0.0
        %v1702 = vand.u32 %v1191, 4294901760
        %1703 = vmatmul.mubr.f32.gmra.mxu0 %v1702
        %v1704 = vpop.f32.mrf.mxu0
        %v1705 = vadd.f32 %v1600, %v1704
        %v1706 = vpop.f32.mrf.mxu0
        %1707 = vmatprep.mubr.f32.mxu0 0.0
        %v1708 = vand.u32 %v1194, 4294901760
        %1709 = vmatmul.mubr.f32.gmra.mxu0 %v1708
        %v1710 = vpop.f32.mrf.mxu0
        %v1711 = vadd.f32 %v1608, %v1710
        %v1712 = vpop.f32.mrf.mxu0
        %1713 = vmatprep.mubr.f32.mxu0 0.0
        %v1714 = vand.u32 %v1197, 4294901760
        %1715 = vmatmul.mubr.f32.gmra.mxu0 %v1714
        %v1716 = vpop.f32.mrf.mxu0
        %v1717 = vadd.f32 %v1616, %v1716
        %v1718 = vpop.f32.mrf.mxu0
        %1719 = vdwg.mxu0
        %1720 = vmatprep.subr.mxu0 0.0
        %1721 = vmatpush1.msra.mxu0 0.0
        %1722 = vmatprep.subr.mxu0 0.0
        %1723 = vmatpush1.msra.mxu0 0.0
        %1724 = vmatprep.subr.mxu0 0.0
        %1725 = vmatpush1.msra.mxu0 0.0
        %1726 = vmatprep.subr.mxu0 0.0
        %1727 = vmatpush1.msra.mxu0 0.0
        %1728 = vmatprep.subr.mxu0 0.0
        %1729 = vmatpush1.msra.mxu0 0.0
        %1730 = vmatprep.subr.mxu0 0.0
        %1731 = vmatpush1.msra.mxu0 0.0
        %1732 = vmatprep.subr.mxu0 0.0
        %1733 = vmatpush1.msra.mxu0 0.0
        %1734 = vmatprep.subr.mxu0 0.0
        %1735 = vmatpush1.msra.mxu0 0.0
        %1736 = vmatprep.subr.mxu0 0.0
        %1737 = vmatpush1.msra.mxu0 0.0
        %1738 = vmatprep.subr.mxu0 0.0
        %1739 = vmatpush1.msra.mxu0 0.0
        %1740 = vmatprep.subr.mxu0 0.0
        %1741 = vmatpush1.msra.mxu0 0.0
        %1742 = vmatprep.subr.mxu0 0.0
        %1743 = vmatpush1.msra.mxu0 0.0
        %1744 = vmatprep.subr.mxu0 0.0
        %v1745 = vand.u32 %v1157, 4294901760
        %1746 = vmatpush1.msra.mxu0 %v1745
        %1747 = vmatprep.subr.mxu0 0.0
        %v1748 = vand.u32 %v1156, 4294901760
        %1749 = vmatpush1.msra.mxu0 %v1748
        %1750 = vmatprep.subr.mxu0 0.0
        %v1751 = vand.u32 %v1155, 4294901760
        %1752 = vmatpush1.msra.mxu0 %v1751
        %1753 = vmatprep.subr.mxu0 0.0
        %v1754 = vand.u32 %v1154, 4294901760
        %1755 = vmatpush1.msra.mxu0 %v1754
        %1756 = vmatprep.subr.mxu0 0.0
        %1757 = vmatpush2.msra.mxu0 0.0
        %1758 = vmatprep.subr.mxu0 0.0
        %1759 = vmatpush2.msra.mxu0 0.0
        %1760 = vmatprep.subr.mxu0 0.0
        %1761 = vmatpush2.msra.mxu0 0.0
        %1762 = vmatprep.subr.mxu0 0.0
        %1763 = vmatpush2.msra.mxu0 0.0
        %1764 = vmatprep.subr.mxu0 0.0
        %1765 = vmatpush2.msra.mxu0 0.0
        %1766 = vmatprep.subr.mxu0 0.0
        %1767 = vmatpush2.msra.mxu0 0.0
        %1768 = vmatprep.subr.mxu0 0.0
        %1769 = vmatpush2.msra.mxu0 0.0
        %1770 = vmatprep.subr.mxu0 0.0
        %1771 = vmatpush2.msra.mxu0 0.0
        %1772 = vmatprep.subr.mxu0 0.0
        %1773 = vmatpush2.msra.mxu0 0.0
        %1774 = vmatprep.subr.mxu0 0.0
        %1775 = vmatpush2.msra.mxu0 0.0
        %1776 = vmatprep.subr.mxu0 0.0
        %1777 = vmatpush2.msra.mxu0 0.0
        %1778 = vmatprep.subr.mxu0 0.0
        %1779 = vmatpush2.msra.mxu0 0.0
        %1780 = vmatprep.subr.mxu0 0.0
        %1781 = vmatpush2.msra.mxu0 0.0
        %1782 = vmatprep.subr.mxu0 0.0
        %1783 = vmatpush2.msra.mxu0 0.0
        %1784 = vmatprep.subr.mxu0 0.0
        %1785 = vmatpush2.msra.mxu0 0.0
        %1786 = vmatprep.subr.mxu0 0.0
        %1787 = vmatpush2.msra.mxu0 0.0
        %1788 = vmatprep.mubr.f32.mxu0 0.0
        %v1789 = vand.u32 %v1188, 4294901760
        %1790 = vmatmul.mubr.f32.gmra.mxu0 %v1789
        %v1791 = vpop.f32.mrf.mxu0
        %v1792 = vadd.f32 %v1699, %v1791
        %v1793 = vpop.f32.mrf.mxu0
        %1794 = vmatprep.mubr.f32.mxu0 0.0
        %v1795 = vand.u32 %v1191, 4294901760
        %1796 = vmatmul.mubr.f32.gmra.mxu0 %v1795
        %v1797 = vpop.f32.mrf.mxu0
        %v1798 = vadd.f32 %v1705, %v1797
        %v1799 = vpop.f32.mrf.mxu0
        %1800 = vmatprep.mubr.f32.mxu0 0.0
        %v1801 = vand.u32 %v1194, 4294901760
        %1802 = vmatmul.mubr.f32.gmra.mxu0 %v1801
        %v1803 = vpop.f32.mrf.mxu0
        %v1804 = vadd.f32 %v1711, %v1803
        %v1805 = vpop.f32.mrf.mxu0
        %1806 = vmatprep.mubr.f32.mxu0 0.0
        %v1807 = vand.u32 %v1197, 4294901760
        %1808 = vmatmul.mubr.f32.gmra.mxu0 %v1807
        %v1809 = vpop.f32.mrf.mxu0
        %v1810 = vadd.f32 %v1717, %v1809
        %v1811 = vpop.f32.mrf.mxu0
        %1812 = vdwg.mxu0
        %v1813 = vtanh.pop %v1792
        %v1814 = vtanh.pop %v1798
        %v1815 = vtanh.pop %v1804
        %v1816 = vtanh.pop %v1810
        %v1817 = vld [vmem:[%s4] sm:$0xff]
        %v1818 = vld [vmem:[%s5] sm:$0xff]
        %1820 = vset.pattern.permute.xlu0 0
        %1821 = vperm.xlu0 %1820, %v1818
        %v1822 = vpop.permute.xlu0 %1821
        %v1825 = vsel %vm1186, %v1817, 0
        %1827 = vmatprep.subr.mxu0 0.0
        %1828 = vmatpush1.msra.mxu0 0.0
        %1829 = vmatprep.subr.mxu0 0.0
        %1830 = vmatpush1.msra.mxu0 0.0
        %1831 = vmatprep.subr.mxu0 0.0
        %1832 = vmatpush1.msra.mxu0 0.0
        %1833 = vmatprep.subr.mxu0 0.0
        %1834 = vmatpush1.msra.mxu0 0.0
        %1835 = vmatprep.subr.mxu0 0.0
        %1836 = vmatpush1.msra.mxu0 0.0
        %1837 = vmatprep.subr.mxu0 0.0
        %1838 = vmatpush1.msra.mxu0 0.0
        %1839 = vmatprep.subr.mxu0 0.0
        %1840 = vmatpush1.msra.mxu0 0.0
        %1841 = vmatprep.subr.mxu0 0.0
        %1842 = vmatpush1.msra.mxu0 0.0
        %1843 = vmatprep.subr.mxu0 0.0
        %1844 = vmatpush1.msra.mxu0 0.0
        %1845 = vmatprep.subr.mxu0 0.0
        %1846 = vmatpush1.msra.mxu0 0.0
        %1847 = vmatprep.subr.mxu0 0.0
        %1848 = vmatpush1.msra.mxu0 0.0
        %1849 = vmatprep.subr.mxu0 0.0
        %1850 = vmatpush1.msra.mxu0 0.0
        %1851 = vmatprep.subr.mxu0 0.0
        %v1852 = vand.u32 %v1816, 4294901760
        %1853 = vmatpush1.msra.mxu0 %v1852
        %1854 = vmatprep.subr.mxu0 0.0
        %v1855 = vand.u32 %v1815, 4294901760
        %1856 = vmatpush1.msra.mxu0 %v1855
        %1857 = vmatprep.subr.mxu0 0.0
        %v1858 = vand.u32 %v1814, 4294901760
        %1859 = vmatpush1.msra.mxu0 %v1858
        %1860 = vmatprep.subr.mxu0 0.0
        %v1861 = vand.u32 %v1813, 4294901760
        %1862 = vmatpush1.msra.mxu0 %v1861
        %1863 = vmatprep.subr.mxu0 0.0
        %1864 = vmatpush2.msra.mxu0 0.0
        %1865 = vmatprep.subr.mxu0 0.0
        %1866 = vmatpush2.msra.mxu0 0.0
        %1867 = vmatprep.subr.mxu0 0.0
        %1868 = vmatpush2.msra.mxu0 0.0
        %1869 = vmatprep.subr.mxu0 0.0
        %1870 = vmatpush2.msra.mxu0 0.0
        %1871 = vmatprep.subr.mxu0 0.0
        %1872 = vmatpush2.msra.mxu0 0.0
        %1873 = vmatprep.subr.mxu0 0.0
        %1874 = vmatpush2.msra.mxu0 0.0
        %1875 = vmatprep.subr.mxu0 0.0
        %1876 = vmatpush2.msra.mxu0 0.0
        %1877 = vmatprep.subr.mxu0 0.0
        %1878 = vmatpush2.msra.mxu0 0.0
        %1879 = vmatprep.subr.mxu0 0.0
        %1880 = vmatpush2.msra.mxu0 0.0
        %1881 = vmatprep.subr.mxu0 0.0
        %1882 = vmatpush2.msra.mxu0 0.0
        %1883 = vmatprep.subr.mxu0 0.0
        %1884 = vmatpush2.msra.mxu0 0.0
        %1885 = vmatprep.subr.mxu0 0.0
        %1886 = vmatpush2.msra.mxu0 0.0
        %1887 = vmatprep.subr.mxu0 0.0
        %1888 = vmatpush2.msra.mxu0 0.0
        %1889 = vmatprep.subr.mxu0 0.0
        %1890 = vmatpush2.msra.mxu0 0.0
        %1891 = vmatprep.subr.mxu0 0.0
        %1892 = vmatpush2.msra.mxu0 0.0
        %1893 = vmatprep.subr.mxu0 0.0
        %1894 = vmatpush2.msra.mxu0 0.0
        %1895 = vmatprep.mubr.f32.mxu0 0.0
        %v1896 = vand.u32 %v1825, 4294901760
        %v1897 = vsub.f32 %v1825, %v1896
        %v1898 = vand.u32 %v1897, 4294901760
        %v1899 = vsub.f32 %v1897, %v1898
        %v1900 = vand.u32 %v1899, 4294901760
        %1901 = vmatmul.mubr.f32.gmra.mxu0 %v1900
        %v1902 = vpop.f32.mrf.mxu0
        %v1903 = vadd.f32 %v1822, %v1902
        %v1904 = vpop.f32.mrf.mxu0
        %1905 = vdwg.mxu0
        %1906 = vmatprep.subr.mxu0 0.0
        %1907 = vmatpush1.msra.mxu0 0.0
        %1908 = vmatprep.subr.mxu0 0.0
        %1909 = vmatpush1.msra.mxu0 0.0
        %1910 = vmatprep.subr.mxu0 0.0
        %1911 = vmatpush1.msra.mxu0 0.0
        %1912 = vmatprep.subr.mxu0 0.0
        %1913 = vmatpush1.msra.mxu0 0.0
        %1914 = vmatprep.subr.mxu0 0.0
        %1915 = vmatpush1.msra.mxu0 0.0
        %1916 = vmatprep.subr.mxu0 0.0
        %1917 = vmatpush1.msra.mxu0 0.0
        %1918 = vmatprep.subr.mxu0 0.0
        %1919 = vmatpush1.msra.mxu0 0.0
        %1920 = vmatprep.subr.mxu0 0.0
        %1921 = vmatpush1.msra.mxu0 0.0
        %1922 = vmatprep.subr.mxu0 0.0
        %1923 = vmatpush1.msra.mxu0 0.0
        %1924 = vmatprep.subr.mxu0 0.0
        %1925 = vmatpush1.msra.mxu0 0.0
        %1926 = vmatprep.subr.mxu0 0.0
        %1927 = vmatpush1.msra.mxu0 0.0
        %1928 = vmatprep.subr.mxu0 0.0
        %1929 = vmatpush1.msra.mxu0 0.0
        %1930 = vmatprep.subr.mxu0 0.0
        %v1931 = vand.u32 %v1816, 4294901760
        %v1932 = vsub.f32 %v1816, %v1931
        %v1933 = vand.u32 %v1932, 4294901760
        %v1934 = vsub.f32 %v1932, %v1933
        %v1935 = vand.u32 %v1934, 4294901760
        %1936 = vmatpush1.msra.mxu0 %v1935
        %1937 = vmatprep.subr.mxu0 0.0
        %v1938 = vand.u32 %v1815, 4294901760
        %v1939 = vsub.f32 %v1815, %v1938
        %v1940 = vand.u32 %v1939, 4294901760
        %v1941 = vsub.f32 %v1939, %v1940
        %v1942 = vand.u32 %v1941, 4294901760
        %1943 = vmatpush1.msra.mxu0 %v1942
        %1944 = vmatprep.subr.mxu0 0.0
        %v1945 = vand.u32 %v1814, 4294901760
        %v1946 = vsub.f32 %v1814, %v1945
        %v1947 = vand.u32 %v1946, 4294901760
        %v1948 = vsub.f32 %v1946, %v1947
        %v1949 = vand.u32 %v1948, 4294901760
        %1950 = vmatpush1.msra.mxu0 %v1949
        %1951 = vmatprep.subr.mxu0 0.0
        %v1952 = vand.u32 %v1813, 4294901760
        %v1953 = vsub.f32 %v1813, %v1952
        %v1954 = vand.u32 %v1953, 4294901760
        %v1955 = vsub.f32 %v1953, %v1954
        %v1956 = vand.u32 %v1955, 4294901760
        %1957 = vmatpush1.msra.mxu0 %v1956
        %1958 = vmatprep.subr.mxu0 0.0
        %1959 = vmatpush2.msra.mxu0 0.0
        %1960 = vmatprep.subr.mxu0 0.0
        %1961 = vmatpush2.msra.mxu0 0.0
        %1962 = vmatprep.subr.mxu0 0.0
        %1963 = vmatpush2.msra.mxu0 0.0
        %1964 = vmatprep.subr.mxu0 0.0
        %1965 = vmatpush2.msra.mxu0 0.0
        %1966 = vmatprep.subr.mxu0 0.0
        %1967 = vmatpush2.msra.mxu0 0.0
        %1968 = vmatprep.subr.mxu0 0.0
        %1969 = vmatpush2.msra.mxu0 0.0
        %1970 = vmatprep.subr.mxu0 0.0
        %1971 = vmatpush2.msra.mxu0 0.0
        %1972 = vmatprep.subr.mxu0 0.0
        %1973 = vmatpush2.msra.mxu0 0.0
        %1974 = vmatprep.subr.mxu0 0.0
        %1975 = vmatpush2.msra.mxu0 0.0
        %1976 = vmatprep.subr.mxu0 0.0
        %1977 = vmatpush2.msra.mxu0 0.0
        %1978 = vmatprep.subr.mxu0 0.0
        %1979 = vmatpush2.msra.mxu0 0.0
        %1980 = vmatprep.subr.mxu0 0.0
        %1981 = vmatpush2.msra.mxu0 0.0
        %1982 = vmatprep.subr.mxu0 0.0
        %1983 = vmatpush2.msra.mxu0 0.0
        %1984 = vmatprep.subr.mxu0 0.0
        %1985 = vmatpush2.msra.mxu0 0.0
        %1986 = vmatprep.subr.mxu0 0.0
        %1987 = vmatpush2.msra.mxu0 0.0
        %1988 = vmatprep.subr.mxu0 0.0
        %1989 = vmatpush2.msra.mxu0 0.0
        %1990 = vmatprep.mubr.f32.mxu0 0.0
        %v1991 = vand.u32 %v1825, 4294901760
        %1992 = vmatmul.mubr.f32.gmra.mxu0 %v1991
        %v1993 = vpop.f32.mrf.mxu0
        %v1994 = vadd.f32 %v1903, %v1993
        %v1995 = vpop.f32.mrf.mxu0
        %1996 = vdwg.mxu0
        %1997 = vmatprep.subr.mxu0 0.0
        %1998 = vmatpush1.msra.mxu0 0.0
        %1999 = vmatprep.subr.mxu0 0.0
        %2000 = vmatpush1.msra.mxu0 0.0
        %2001 = vmatprep.subr.mxu0 0.0
        %2002 = vmatpush1.msra.mxu0 0.0
        %2003 = vmatprep.subr.mxu0 0.0
        %2004 = vmatpush1.msra.mxu0 0.0
        %2005 = vmatprep.subr.mxu0 0.0
        %2006 = vmatpush1.msra.mxu0 0.0
        %2007 = vmatprep.subr.mxu0 0.0
        %2008 = vmatpush1.msra.mxu0 0.0
        %2009 = vmatprep.subr.mxu0 0.0
        %2010 = vmatpush1.msra.mxu0 0.0
        %2011 = vmatprep.subr.mxu0 0.0
        %2012 = vmatpush1.msra.mxu0 0.0
        %2013 = vmatprep.subr.mxu0 0.0
        %2014 = vmatpush1.msra.mxu0 0.0
        %2015 = vmatprep.subr.mxu0 0.0
        %2016 = vmatpush1.msra.mxu0 0.0
        %2017 = vmatprep.subr.mxu0 0.0
        %2018 = vmatpush1.msra.mxu0 0.0
        %2019 = vmatprep.subr.mxu0 0.0
        %2020 = vmatpush1.msra.mxu0 0.0
        %2021 = vmatprep.subr.mxu0 0.0
        %v2022 = vand.u32 %v1816, 4294901760
        %v2023 = vsub.f32 %v1816, %v2022
        %2024 = vmatpush1.msra.mxu0 %v2023
        %2025 = vmatprep.subr.mxu0 0.0
        %v2026 = vand.u32 %v1815, 4294901760
        %v2027 = vsub.f32 %v1815, %v2026
        %2028 = vmatpush1.msra.mxu0 %v2027
        %2029 = vmatprep.subr.mxu0 0.0
        %v2030 = vand.u32 %v1814, 4294901760
        %v2031 = vsub.f32 %v1814, %v2030
        %2032 = vmatpush1.msra.mxu0 %v2031
        %2033 = vmatprep.subr.mxu0 0.0
        %v2034 = vand.u32 %v1813, 4294901760
        %v2035 = vsub.f32 %v1813, %v2034
        %2036 = vmatpush1.msra.mxu0 %v2035
        %2037 = vmatprep.subr.mxu0 0.0
        %2038 = vmatpush2.msra.mxu0 0.0
        %2039 = vmatprep.subr.mxu0 0.0
        %2040 = vmatpush2.msra.mxu0 0.0
        %2041 = vmatprep.subr.mxu0 0.0
        %2042 = vmatpush2.msra.mxu0 0.0
        %2043 = vmatprep.subr.mxu0 0.0
        %2044 = vmatpush2.msra.mxu0 0.0
        %2045 = vmatprep.subr.mxu0 0.0
        %2046 = vmatpush2.msra.mxu0 0.0
        %2047 = vmatprep.subr.mxu0 0.0
        %2048 = vmatpush2.msra.mxu0 0.0
        %2049 = vmatprep.subr.mxu0 0.0
        %2050 = vmatpush2.msra.mxu0 0.0
        %2051 = vmatprep.subr.mxu0 0.0
        %2052 = vmatpush2.msra.mxu0 0.0
        %2053 = vmatprep.subr.mxu0 0.0
        %2054 = vmatpush2.msra.mxu0 0.0
        %2055 = vmatprep.subr.mxu0 0.0
        %2056 = vmatpush2.msra.mxu0 0.0
        %2057 = vmatprep.subr.mxu0 0.0
        %2058 = vmatpush2.msra.mxu0 0.0
        %2059 = vmatprep.subr.mxu0 0.0
        %2060 = vmatpush2.msra.mxu0 0.0
        %2061 = vmatprep.subr.mxu0 0.0
        %2062 = vmatpush2.msra.mxu0 0.0
        %2063 = vmatprep.subr.mxu0 0.0
        %2064 = vmatpush2.msra.mxu0 0.0
        %2065 = vmatprep.subr.mxu0 0.0
        %2066 = vmatpush2.msra.mxu0 0.0
        %2067 = vmatprep.subr.mxu0 0.0
        %2068 = vmatpush2.msra.mxu0 0.0
        %2069 = vmatprep.mubr.f32.mxu0 0.0
        %v2070 = vand.u32 %v1825, 4294901760
        %v2071 = vsub.f32 %v1825, %v2070
        %2072 = vmatmul.mubr.f32.gmra.mxu0 %v2071
        %v2073 = vpop.f32.mrf.mxu0
        %v2074 = vadd.f32 %v1994, %v2073
        %v2075 = vpop.f32.mrf.mxu0
        %2076 = vdwg.mxu0
        %2077 = vmatprep.subr.mxu0 0.0
        %2078 = vmatpush1.msra.mxu0 0.0
        %2079 = vmatprep.subr.mxu0 0.0
        %2080 = vmatpush1.msra.mxu0 0.0
        %2081 = vmatprep.subr.mxu0 0.0
        %2082 = vmatpush1.msra.mxu0 0.0
        %2083 = vmatprep.subr.mxu0 0.0
        %2084 = vmatpush1.msra.mxu0 0.0
        %2085 = vmatprep.subr.mxu0 0.0
        %2086 = vmatpush1.msra.mxu0 0.0
        %2087 = vmatprep.subr.mxu0 0.0
        %2088 = vmatpush1.msra.mxu0 0.0
        %2089 = vmatprep.subr.mxu0 0.0
        %2090 = vmatpush1.msra.mxu0 0.0
        %2091 = vmatprep.subr.mxu0 0.0
        %2092 = vmatpush1.msra.mxu0 0.0
        %2093 = vmatprep.subr.mxu0 0.0
        %2094 = vmatpush1.msra.mxu0 0.0
        %2095 = vmatprep.subr.mxu0 0.0
        %2096 = vmatpush1.msra.mxu0 0.0
        %2097 = vmatprep.subr.mxu0 0.0
        %2098 = vmatpush1.msra.mxu0 0.0
        %2099 = vmatprep.subr.mxu0 0.0
        %2100 = vmatpush1.msra.mxu0 0.0
        %2101 = vmatprep.subr.mxu0 0.0
        %v2102 = vand.u32 %v1816, 4294901760
        %2103 = vmatpush1.msra.mxu0 %v2102
        %2104 = vmatprep.subr.mxu0 0.0
        %v2105 = vand.u32 %v1815, 4294901760
        %2106 = vmatpush1.msra.mxu0 %v2105
        %2107 = vmatprep.subr.mxu0 0.0
        %v2108 = vand.u32 %v1814, 4294901760
        %2109 = vmatpush1.msra.mxu0 %v2108
        %2110 = vmatprep.subr.mxu0 0.0
        %v2111 = vand.u32 %v1813, 4294901760
        %2112 = vmatpush1.msra.mxu0 %v2111
        %2113 = vmatprep.subr.mxu0 0.0
        %2114 = vmatpush2.msra.mxu0 0.0
        %2115 = vmatprep.subr.mxu0 0.0
        %2116 = vmatpush2.msra.mxu0 0.0
        %2117 = vmatprep.subr.mxu0 0.0
        %2118 = vmatpush2.msra.mxu0 0.0
        %2119 = vmatprep.subr.mxu0 0.0
        %2120 = vmatpush2.msra.mxu0 0.0
        %2121 = vmatprep.subr.mxu0 0.0
        %2122 = vmatpush2.msra.mxu0 0.0
        %2123 = vmatprep.subr.mxu0 0.0
        %2124 = vmatpush2.msra.mxu0 0.0
        %2125 = vmatprep.subr.mxu0 0.0
        %2126 = vmatpush2.msra.mxu0 0.0
        %2127 = vmatprep.subr.mxu0 0.0
        %2128 = vmatpush2.msra.mxu0 0.0
        %2129 = vmatprep.subr.mxu0 0.0
        %2130 = vmatpush2.msra.mxu0 0.0
        %2131 = vmatprep.subr.mxu0 0.0
        %2132 = vmatpush2.msra.mxu0 0.0
        %2133 = vmatprep.subr.mxu0 0.0
        %2134 = vmatpush2.msra.mxu0 0.0
        %2135 = vmatprep.subr.mxu0 0.0
        %2136 = vmatpush2.msra.mxu0 0.0
        %2137 = vmatprep.subr.mxu0 0.0
        %2138 = vmatpush2.msra.mxu0 0.0
        %2139 = vmatprep.subr.mxu0 0.0
        %2140 = vmatpush2.msra.mxu0 0.0
        %2141 = vmatprep.subr.mxu0 0.0
        %2142 = vmatpush2.msra.mxu0 0.0
        %2143 = vmatprep.subr.mxu0 0.0
        %2144 = vmatpush2.msra.mxu0 0.0
        %2145 = vmatprep.mubr.f32.mxu0 0.0
        %v2146 = vand.u32 %v1825, 4294901760
        %v2147 = vsub.f32 %v1825, %v2146
        %v2148 = vand.u32 %v2147, 4294901760
        %2149 = vmatmul.mubr.f32.gmra.mxu0 %v2148
        %v2150 = vpop.f32.mrf.mxu0
        %v2151 = vadd.f32 %v2074, %v2150
        %v2152 = vpop.f32.mrf.mxu0
        %2153 = vdwg.mxu0
        %2154 = vmatprep.subr.mxu0 0.0
        %2155 = vmatpush1.msra.mxu0 0.0
        %2156 = vmatprep.subr.mxu0 0.0
        %2157 = vmatpush1.msra.mxu0 0.0
        %2158 = vmatprep.subr.mxu0 0.0
        %2159 = vmatpush1.msra.mxu0 0.0
        %2160 = vmatprep.subr.mxu0 0.0
        %2161 = vmatpush1.msra.mxu0 0.0
        %2162 = vmatprep.subr.mxu0 0.0
        %2163 = vmatpush1.msra.mxu0 0.0
        %2164 = vmatprep.subr.mxu0 0.0
        %2165 = vmatpush1.msra.mxu0 0.0
        %2166 = vmatprep.subr.mxu0 0.0
        %2167 = vmatpush1.msra.mxu0 0.0
        %2168 = vmatprep.subr.mxu0 0.0
        %2169 = vmatpush1.msra.mxu0 0.0
        %2170 = vmatprep.subr.mxu0 0.0
        %2171 = vmatpush1.msra.mxu0 0.0
        %2172 = vmatprep.subr.mxu0 0.0
        %2173 = vmatpush1.msra.mxu0 0.0
        %2174 = vmatprep.subr.mxu0 0.0
        %2175 = vmatpush1.msra.mxu0 0.0
        %2176 = vmatprep.subr.mxu0 0.0
        %2177 = vmatpush1.msra.mxu0 0.0
        %2178 = vmatprep.subr.mxu0 0.0
        %v2179 = vand.u32 %v1816, 4294901760
        %v2180 = vsub.f32 %v1816, %v2179
        %v2181 = vand.u32 %v2180, 4294901760
        %2182 = vmatpush1.msra.mxu0 %v2181
        %2183 = vmatprep.subr.mxu0 0.0
        %v2184 = vand.u32 %v1815, 4294901760
        %v2185 = vsub.f32 %v1815, %v2184
        %v2186 = vand.u32 %v2185, 4294901760
        %2187 = vmatpush1.msra.mxu0 %v2186
        %2188 = vmatprep.subr.mxu0 0.0
        %v2189 = vand.u32 %v1814, 4294901760
        %v2190 = vsub.f32 %v1814, %v2189
        %v2191 = vand.u32 %v2190, 4294901760
        %2192 = vmatpush1.msra.mxu0 %v2191
        %2193 = vmatprep.subr.mxu0 0.0
        %v2194 = vand.u32 %v1813, 4294901760
        %v2195 = vsub.f32 %v1813, %v2194
        %v2196 = vand.u32 %v2195, 4294901760
        %2197 = vmatpush1.msra.mxu0 %v2196
        %2198 = vmatprep.subr.mxu0 0.0
        %2199 = vmatpush2.msra.mxu0 0.0
        %2200 = vmatprep.subr.mxu0 0.0
        %2201 = vmatpush2.msra.mxu0 0.0
        %2202 = vmatprep.subr.mxu0 0.0
        %2203 = vmatpush2.msra.mxu0 0.0
        %2204 = vmatprep.subr.mxu0 0.0
        %2205 = vmatpush2.msra.mxu0 0.0
        %2206 = vmatprep.subr.mxu0 0.0
        %2207 = vmatpush2.msra.mxu0 0.0
        %2208 = vmatprep.subr.mxu0 0.0
        %2209 = vmatpush2.msra.mxu0 0.0
        %2210 = vmatprep.subr.mxu0 0.0
        %2211 = vmatpush2.msra.mxu0 0.0
        %2212 = vmatprep.subr.mxu0 0.0
        %2213 = vmatpush2.msra.mxu0 0.0
        %2214 = vmatprep.subr.mxu0 0.0
        %2215 = vmatpush2.msra.mxu0 0.0
        %2216 = vmatprep.subr.mxu0 0.0
        %2217 = vmatpush2.msra.mxu0 0.0
        %2218 = vmatprep.subr.mxu0 0.0
        %2219 = vmatpush2.msra.mxu0 0.0
        %2220 = vmatprep.subr.mxu0 0.0
        %2221 = vmatpush2.msra.mxu0 0.0
        %2222 = vmatprep.subr.mxu0 0.0
        %2223 = vmatpush2.msra.mxu0 0.0
        %2224 = vmatprep.subr.mxu0 0.0
        %2225 = vmatpush2.msra.mxu0 0.0
        %2226 = vmatprep.subr.mxu0 0.0
        %2227 = vmatpush2.msra.mxu0 0.0
        %2228 = vmatprep.subr.mxu0 0.0
        %2229 = vmatpush2.msra.mxu0 0.0
        %2230 = vmatprep.mubr.f32.mxu0 0.0
        %v2231 = vand.u32 %v1825, 4294901760
        %2232 = vmatmul.mubr.f32.gmra.mxu0 %v2231
        %v2233 = vpop.f32.mrf.mxu0
        %v2234 = vadd.f32 %v2151, %v2233
        %v2235 = vpop.f32.mrf.mxu0
        %2236 = vdwg.mxu0
        %2237 = vmatprep.subr.mxu0 0.0
        %2238 = vmatpush1.msra.mxu0 0.0
        %2239 = vmatprep.subr.mxu0 0.0
        %2240 = vmatpush1.msra.mxu0 0.0
        %2241 = vmatprep.subr.mxu0 0.0
        %2242 = vmatpush1.msra.mxu0 0.0
        %2243 = vmatprep.subr.mxu0 0.0
        %2244 = vmatpush1.msra.mxu0 0.0
        %2245 = vmatprep.subr.mxu0 0.0
        %2246 = vmatpush1.msra.mxu0 0.0
        %2247 = vmatprep.subr.mxu0 0.0
        %2248 = vmatpush1.msra.mxu0 0.0
        %2249 = vmatprep.subr.mxu0 0.0
        %2250 = vmatpush1.msra.mxu0 0.0
        %2251 = vmatprep.subr.mxu0 0.0
        %2252 = vmatpush1.msra.mxu0 0.0
        %2253 = vmatprep.subr.mxu0 0.0
        %2254 = vmatpush1.msra.mxu0 0.0
        %2255 = vmatprep.subr.mxu0 0.0
        %2256 = vmatpush1.msra.mxu0 0.0
        %2257 = vmatprep.subr.mxu0 0.0
        %2258 = vmatpush1.msra.mxu0 0.0
        %2259 = vmatprep.subr.mxu0 0.0
        %2260 = vmatpush1.msra.mxu0 0.0
        %2261 = vmatprep.subr.mxu0 0.0
        %v2262 = vand.u32 %v1816, 4294901760
        %2263 = vmatpush1.msra.mxu0 %v2262
        %2264 = vmatprep.subr.mxu0 0.0
        %v2265 = vand.u32 %v1815, 4294901760
        %2266 = vmatpush1.msra.mxu0 %v2265
        %2267 = vmatprep.subr.mxu0 0.0
        %v2268 = vand.u32 %v1814, 4294901760
        %2269 = vmatpush1.msra.mxu0 %v2268
        %2270 = vmatprep.subr.mxu0 0.0
        %v2271 = vand.u32 %v1813, 4294901760
        %2272 = vmatpush1.msra.mxu0 %v2271
        %2273 = vmatprep.subr.mxu0 0.0
        %2274 = vmatpush2.msra.mxu0 0.0
        %2275 = vmatprep.subr.mxu0 0.0
        %2276 = vmatpush2.msra.mxu0 0.0
        %2277 = vmatprep.subr.mxu0 0.0
        %2278 = vmatpush2.msra.mxu0 0.0
        %2279 = vmatprep.subr.mxu0 0.0
        %2280 = vmatpush2.msra.mxu0 0.0
        %2281 = vmatprep.subr.mxu0 0.0
        %2282 = vmatpush2.msra.mxu0 0.0
        %2283 = vmatprep.subr.mxu0 0.0
        %2284 = vmatpush2.msra.mxu0 0.0
        %2285 = vmatprep.subr.mxu0 0.0
        %2286 = vmatpush2.msra.mxu0 0.0
        %2287 = vmatprep.subr.mxu0 0.0
        %2288 = vmatpush2.msra.mxu0 0.0
        %2289 = vmatprep.subr.mxu0 0.0
        %2290 = vmatpush2.msra.mxu0 0.0
        %2291 = vmatprep.subr.mxu0 0.0
        %2292 = vmatpush2.msra.mxu0 0.0
        %2293 = vmatprep.subr.mxu0 0.0
        %2294 = vmatpush2.msra.mxu0 0.0
        %2295 = vmatprep.subr.mxu0 0.0
        %2296 = vmatpush2.msra.mxu0 0.0
        %2297 = vmatprep.subr.mxu0 0.0
        %2298 = vmatpush2.msra.mxu0 0.0
        %2299 = vmatprep.subr.mxu0 0.0
        %2300 = vmatpush2.msra.mxu0 0.0
        %2301 = vmatprep.subr.mxu0 0.0
        %2302 = vmatpush2.msra.mxu0 0.0
        %2303 = vmatprep.subr.mxu0 0.0
        %2304 = vmatpush2.msra.mxu0 0.0
        %2305 = vmatprep.mubr.f32.mxu0 0.0
        %v2306 = vand.u32 %v1825, 4294901760
        %2307 = vmatmul.mubr.f32.gmra.mxu0 %v2306
        %v2308 = vpop.f32.mrf.mxu0
        %v2309 = vadd.f32 %v2234, %v2308
        %v2310 = vpop.f32.mrf.mxu0
        %2311 = vdwg.mxu0
        %2312 = vst [vmem:[%s272] sm:$0xff] %v2309
        %s2313 = sand.u32 %s181, 1
        %s2314 = scalar_lea.sflag [#allocation3], %s2313
        %s2315 = sand.u32 %s181, 1
        %s2316 = smul.addr %s2315, 8
        %s2317 = scalar_lea.vmem [#allocation2], %s2316
        // Predicated region
        $region49: #{tpu_custom_call.1} parent=47 // pred_check
          %p2318 = pneg %p191
        $region50: #{tpu_custom_call.1} parent=47 // pred_check_branch
          %2320 = sbr.rel (%p2318) target = $region52
        $region51: #{tpu_custom_call.1} parent=47 // pred_region
          %s2322 = ssub.s32 128, 128
          %2323 = vsyncadd %s2314, %s2322
          %s2324 = smul.addr %s21, 128
          %s2325 = scalar_lea.hbm %s7, %s2324
          %s2327 = sshll.u32 %s2317, 4
          %s2328 = int_to_ptr.vmem [resolvable:$true] %s2327
          %2330 = dma.vmem_to_hbm [thread:$0]  %s2328, 128, %s2325, %s2314
        $region52: #{tpu_custom_call.1} parent=47 // pred_fallthru
          _
      $region48: #{tpu_custom_call.1} parent=5 // pred_fallthru
        _
      %p2331 = scmp.le.s32.totalorder 2, %s16
      // Predicated region
      $region53: #{tpu_custom_call.1} parent=5 // pred_check
        %p2332 = pneg %p2331
      $region54: #{tpu_custom_call.1} parent=5 // pred_check_branch
        %2334 = sbr.rel (%p2332) target = $region56
      $region55: #{tpu_custom_call.1} parent=5 // pred_region
        %s2335 = ssub.s32 %s16, 2
        // Predicated region
        $region57: #{tpu_custom_call.1} parent=55 // pred_check
          %p2336 = pneg %p197
        $region58: #{tpu_custom_call.1} parent=55 // pred_check_branch
          %2338 = sbr.rel (%p2336) target = $region60
        $region59: #{tpu_custom_call.1} parent=55 // pred_region
          %s2339 = sand.u32 %s182, 1
          %s2340 = scalar_lea.sflag [#allocation3], %s2339
          %s2341 = sand.u32 %s182, 1
          %s2342 = smul.addr %s2341, 8
          %s2343 = scalar_lea.vmem [#allocation2], %s2342
          %2344 = dma.done %s2340, 128
        $region60: #{tpu_custom_call.1} parent=55 // pred_fallthru
          _
      $region56: #{tpu_custom_call.1} parent=5 // pred_fallthru
        _
    $region6: #{tpu_custom_call.1} parent=1 // loop_footer
      %s20 = sadd.s32 1, %s16
    $region7: #{tpu_custom_call.1} parent=1 // loop_footer_branch
      %15 = sbr.rel target = $region3
    $region8: #{tpu_custom_call.1} parent=1 // loop_exit
      _
    %2345 = vsyncpa [#allocation3], 1
    %s2346 = scalar_lea.sflag [#allocation3], 1
    %2347 = vsyncpa %s2346, 1

</llo_original>
